<compile_context>
chip_gen: v6e
topology: v6e:2x2x1
jax: 0.10.0
libtpu: 0.0.40
codegen_flags: <defaults>
</compile_context>

<pallas_src>
import functools

import jax
import jax.numpy as jnp
from jax import lax
from jax.experimental import pallas as pl
from jax.experimental.pallas import tpu as pltpu


# ----------------------------------------------------------------------------
# Tiling helpers
# ----------------------------------------------------------------------------
def _pick_tile_h(H, need_even):
    """H-band tile.  Small maps (<=28) take the whole height so the matmul M
    dimension (TH*W) actually fills the MXU; larger maps use 16/28-row bands."""
    if H <= 28:
        return H
    cap = 28 if H <= 64 else 16
    divs = [t for t in range(1, H + 1)
            if H % t == 0 and (not need_even or t % 2 == 0)]
    cand = [t for t in divs if t <= cap]
    if cand:
        return max(cand)
    return min(divs) if divs else H


def _pick_tile_cout(Cout):
    # 256-wide Cout tiles for the 512-channel layers keep the weight block
    # ~2.4 MB and give a >=2-iteration parallel axis for 2-TC (v7x) sharding.
    if Cout > 256 and Cout % 256 == 0:
        return 256
    return Cout


def _largest_divisor_leq(n, cap):
    for d in range(min(n, cap), 0, -1):
        if n % d == 0:
            return d
    return 1


# ----------------------------------------------------------------------------
# Conv2d(3x3, padding=1) + ReLU (+ optional fused MaxPool2d(2,2)) kernel
# ----------------------------------------------------------------------------
def _conv3x3_relu_kernel(xc_ref, xt_ref, xb_ref, w_ref, b_ref, o_ref, band_ref,
                         *, TH, W, Cin, TCout, pool, fold_k):
    # Grid: (N, Cout-tiles, H-tiles); H is innermost so the weight block stays
    # resident across the inner loop.
    #   xc_ref  : (1, TH, W, Cin)   rows [i*TH, (i+1)*TH) of the unpadded input
    #   xt_ref  : (1, 1,  W, Cin)   row above the band (clamped at the edge)
    #   xb_ref  : (1, 1,  W, Cin)   row below the band (clamped at the edge)
    #   w_ref   : (9, Cin, TCout)   per-tap weights   [shift-accumulate path]
    #             (9*Cin, TCout)    K-folded weights  [fold_k first-layer path]
    #   b_ref   : (1, TCout)        float32 bias
    #   o_ref   : (1, TH, W, TCout) or (1, TH//2, W//2, TCout) when pool=True
    #   band_ref: (TH+2, W+2, Cin)  VMEM scratch, zero-padded activation band
    i = pl.program_id(2)
    nh = pl.num_programs(2)
    dt = band_ref.dtype

    # --- Stage the zero-padded band in VMEM scratch (no value concatenates).
    zcol = jnp.zeros((TH + 2, Cin), dt)
    band_ref[:, 0, :] = zcol                     # left padding column
    band_ref[:, W + 1, :] = zcol                 # right padding column
    band_ref[1:TH + 1, 1:W + 1, :] = xc_ref[0]   # center rows
    top = xt_ref[0, 0]                           # (W, Cin)
    bot = xb_ref[0, 0]
    band_ref[0, 1:W + 1, :] = jnp.where(i > 0, top, jnp.zeros_like(top))
    band_ref[TH + 1, 1:W + 1, :] = jnp.where(i < nh - 1, bot,
                                             jnp.zeros_like(bot))

    # --- Conv as MXU dots, f32 accumulation.
    if fold_k:
        # Tiny-Cin first layer only: fold all 9 taps into K = 9*Cin (one dot).
        taps = [band_ref[dy:dy + TH, dx:dx + W, :]
                for dy in range(3) for dx in range(3)]
        patch = jnp.concatenate(taps, axis=-1).reshape(TH * W, 9 * Cin)
        acc = jnp.dot(patch, w_ref[...], preferred_element_type=jnp.float32)
    else:
        # 9 shift-and-accumulate dots: K = Cin (>=64) already fills the MXU
        # depth, and the accumulation rides the MXU result path.
        acc = None
        for k in range(9):
            dy, dx = k // 3, k % 3
            tap = band_ref[dy:dy + TH, dx:dx + W, :].reshape(TH * W, Cin)
            d = jnp.dot(tap, w_ref[k], preferred_element_type=jnp.float32)
            acc = d if acc is None else acc + d

    # --- Epilogue in f32: bias + ReLU (+ fused 2x2 max-pool), single bf16 cast.
    acc = jnp.maximum(acc + b_ref[...], 0.0)               # (TH*W, TCout) f32
    y = acc.reshape(TH, W, TCout)
    if pool:  # fused MaxPool2d(2, 2)
        y = y.reshape(TH // 2, 2, W // 2, 2, TCout)
        y = jnp.max(jnp.max(y, axis=3), axis=1)
    o_ref[0] = y.astype(o_ref.dtype)


def conv3x3_relu(x, w, b, *, pool=False):
    """x: (N, H, W, Cin) NHWC bf16; w: (3,3,Cin,Cout) HWIO; b: (Cout,).
    Returns NHWC bf16 of shape (N, H, W, Cout) or pooled (N, H/2, W/2, Cout)."""
    N, H, W, Cin = x.shape
    Cout = w.shape[-1]
    if pool:
        assert H % 2 == 0 and W % 2 == 0, "fused pool needs even H, W"
    TH = _pick_tile_h(H, need_even=pool)
    TCout = _pick_tile_cout(Cout)
    fold_k = Cin < 8   # only the tiny-Cin first layer uses in-kernel im2col

    if fold_k:
        w_arg = w.reshape(9 * Cin, Cout).astype(jnp.bfloat16)
        w_spec = pl.BlockSpec((9 * Cin, TCout), lambda n, j, i: (0, j))
    else:
        w_arg = w.reshape(9, Cin, Cout).astype(jnp.bfloat16)
        w_spec = pl.BlockSpec((9, Cin, TCout), lambda n, j, i: (0, 0, j))
    b2 = b.reshape(1, Cout).astype(jnp.float32)

    Ho, Wo = (H // 2, W // 2) if pool else (H, W)
    THo = TH // 2 if pool else TH

    kernel = functools.partial(_conv3x3_relu_kernel, TH=TH, W=W, Cin=Cin,
                               TCout=TCout, pool=pool, fold_k=fold_k)

    return pl.pallas_call(
        kernel,
        out_shape=jax.ShapeDtypeStruct((N, Ho, Wo, Cout), jnp.bfloat16),
        # H innermost -> weight block index constant across the inner loop
        # (Pallas skips its re-DMA); N / Cout tiles are the parallel axes.
        grid=(N, Cout // TCout, H // TH),
        in_specs=[
            # Center row band of the tile (no halo).
            pl.BlockSpec((1, TH, W, Cin), lambda n, j, i: (n, i, 0, 0)),
            # Halo row above (clamped at the top edge; zeroed in-kernel).
            pl.BlockSpec((1, 1, W, Cin),
                         lambda n, j, i: (n, jnp.maximum(i * TH - 1, 0), 0, 0)),
            # Halo row below (clamped at the bottom edge; zeroed in-kernel).
            pl.BlockSpec((1, 1, W, Cin),
                         lambda n, j, i: (n, jnp.minimum((i + 1) * TH, H - 1), 0, 0)),
            # Weights (Cout-tiled; independent of i) and bias.
            w_spec,
            pl.BlockSpec((1, TCout), lambda n, j, i: (0, j)),
        ],
        out_specs=pl.BlockSpec((1, THo, Wo, TCout), lambda n, j, i: (n, i, 0, j)),
        scratch_shapes=[pltpu.VMEM((TH + 2, W + 2, Cin), jnp.bfloat16)],
        compiler_params=pltpu.CompilerParams(
            dimension_semantics=("parallel", "parallel", "arbitrary")),
    )(x, x, x, w_arg, b2)


# ----------------------------------------------------------------------------
# Standalone MaxPool2d(kernel=2, stride=2) kernel (used when "M" is not fused)
# ----------------------------------------------------------------------------
def _maxpool2x2_kernel(x_ref, o_ref):
    x = x_ref[0]                                # (2*THo, W, C) value
    h2, w2, c = x.shape
    x = x.reshape(h2 // 2, 2, w2 // 2, 2, c)
    o_ref[0] = jnp.max(jnp.max(x, axis=3), axis=1)


def maxpool2x2(x):
    """x: (N, H, W, C) NHWC with even H, W."""
    N, H, W, C = x.shape
    assert H % 2 == 0 and W % 2 == 0
    Ho, Wo = H // 2, W // 2
    THo = _largest_divisor_leq(Ho, 8)
    return pl.pallas_call(
        _maxpool2x2_kernel,
        out_shape=jax.ShapeDtypeStruct((N, Ho, Wo, C), x.dtype),
        grid=(N, Ho // THo),
        in_specs=[pl.BlockSpec((1, 2 * THo, W, C), lambda n, i: (n, i, 0, 0))],
        out_specs=pl.BlockSpec((1, THo, Wo, C), lambda n, i: (n, i, 0, 0)),
        compiler_params=pltpu.CompilerParams(
            dimension_semantics=("parallel", "parallel")),
    )(x)


# ----------------------------------------------------------------------------
# VGG feature stack (make_layers-style) + deterministic init
# ----------------------------------------------------------------------------
def init_vgg_params(key, in_channels, cfg):
    """Kaiming-normal(fan_out, relu) conv weights, zero biases — matches
    VGG._initialize_weights for Conv2d layers."""
    layers = []
    c = in_channels
    for v in cfg:
        if v == "M":
            layers.append(("M", None))
            continue
        key, wk = jax.random.split(key)
        fan_out = v * 3 * 3
        std = (2.0 / fan_out) ** 0.5
        w = std * jax.random.normal(wk, (3, 3, c, v), jnp.float32)    # HWIO
        b = jnp.zeros((v,), jnp.float32)
        layers.append(("C", (w, b)))
        c = v
    return layers


def vgg_features(x_nchw, layers, *, fuse_pool=True):
    """Forward pass of VGG.features. Input/output are NCHW (PyTorch layout)."""
    x = jnp.transpose(x_nchw, (0, 2, 3, 1)).astype(jnp.bfloat16)      # NCHW -> NHWC
    i = 0
    while i < len(layers):
        kind, p = layers[i]
        if kind == "M":
            x = maxpool2x2(x)
            i += 1
        else:
            w, b = p
            pool = fuse_pool and (i + 1 < len(layers)) and layers[i + 1][0] == "M"
            x = conv3x3_relu(x, w, b, pool=pool)
            i += 2 if pool else 1
    return jnp.transpose(x, (0, 3, 1, 2))                             # NHWC -> NCHW


# ----------------------------------------------------------------------------
# Pure-JAX reference with matching bf16 quantization (correctness check only)
# Note: bf16 inter-layer activations drift slightly from a torch f32 run; the
# 5e-2 tolerance below accounts for that.
# ----------------------------------------------------------------------------
def vgg_features_ref(x_nchw, layers):
    x = x_nchw.astype(jnp.bfloat16)
    for kind, p in layers:
        if kind == "M":
            x = lax.reduce_window(x, jnp.array(-jnp.inf, x.dtype), lax.max,
                                  (1, 1, 2, 2), (1, 1, 2, 2), "VALID")
        else:
            w, b = p
            y = lax.conv_general_dilated(
                x, w.astype(jnp.bfloat16), window_strides=(1, 1), padding="SAME",
                dimension_numbers=("NCHW", "HWIO", "NCHW"),
                preferred_element_type=jnp.float32)
            y = y + b[None, :, None, None]
            x = jnp.maximum(y, 0.0).astype(jnp.bfloat16)
    return x


if __name__ == "__main__":
    key = jax.random.PRNGKey(0)
    kx, kp = jax.random.split(key)

    # Small VGG-style config: conv8 -> conv8 -> pool -> conv16 -> pool
    # (first conv hits the K-folded tiny-Cin path, the rest hit the
    #  shift-and-accumulate path; both pool paths are exercised).
    cfg = [8, 8, "M", 16, "M"]
    in_channels = 4
    x = jax.random.normal(kx, (2, in_channels, 16, 16), jnp.float32)  # NCHW
    layers = init_vgg_params(kp, in_channels, cfg)

    y_fused = jax.block_until_ready(vgg_features(x, layers, fuse_pool=True))
    y_split = jax.block_until_ready(vgg_features(x, layers, fuse_pool=False))
    assert y_fused.shape == (2, 16, 4, 4), y_fused.shape
    assert y_split.shape == (2, 16, 4, 4), y_split.shape

    y_ref = vgg_features_ref(x, layers)
    ok_fused = jnp.allclose(y_fused.astype(jnp.float32), y_ref.astype(jnp.float32),
                            rtol=5e-2, atol=5e-2)
    ok_split = jnp.allclose(y_split.astype(jnp.float32), y_ref.astype(jnp.float32),
                            rtol=5e-2, atol=5e-2)
    assert ok_fused, "fused conv+pool mismatch vs reference"
    assert ok_split, "standalone pool path mismatch vs reference"

    print("KERNEL_OK")
</pallas_src>

<mosaic_0001>
module attributes {stable_mosaic.version = 11 : i64} {
  func.func @_conv3x3_relu_kernel(%arg0: i32, %arg1: i32, %arg2: i32, %arg3: memref<1x16x16x4xbf16, #tpu.memory_space<vmem>>, %arg4: memref<1x1x16x4xbf16, #tpu.memory_space<vmem>>, %arg5: memref<1x1x16x4xbf16, #tpu.memory_space<vmem>>, %arg6: memref<36x8xbf16, #tpu.memory_space<vmem>>, %arg7: memref<1x8xf32, #tpu.memory_space<vmem>>, %arg8: memref<1x16x16x8xbf16, #tpu.memory_space<vmem>>, %arg9: memref<18x18x4xbf16, #tpu.memory_space<vmem>>) attributes {dimension_semantics = [#tpu.dimension_semantics<parallel>, #tpu.dimension_semantics<parallel>, #tpu.dimension_semantics<arbitrary>], iteration_bounds = array<i64: 2, 1, 1>, scalar_prefetch = 0 : i64, scratch_operands = 1 : i64, tpu.core_type = #tpu.core_type<tc>, window_params = [{transform_indices = @transform_0, window_bounds = array<i64: 1, 16, 16, 4>}, {transform_indices = @transform_1, window_bounds = array<i64: 1, 1, 16, 4>}, {transform_indices = @transform_2, window_bounds = array<i64: 1, 1, 16, 4>}, {transform_indices = @transform_3, window_bounds = array<i64: 36, 8>}, {transform_indices = @transform_4, window_bounds = array<i64: 1, 8>}, {transform_indices = @transform_5, window_bounds = array<i64: 1, 16, 16, 8>}]} {
    %cst = arith.constant 0.000000e+00 : bf16
    %0 = vector.broadcast %cst : bf16 to vector<18x4xbf16>
    %c0 = arith.constant 0 : index
    %c0_0 = arith.constant 0 : index
    %c0_1 = arith.constant 0 : index
    %1 = vector.load %arg9[%c0, %c0_0, %c0_1] : memref<18x18x4xbf16, #tpu.memory_space<vmem>>, vector<18x1x4xbf16>
    %2 = vector.shape_cast %1 : vector<18x1x4xbf16> to vector<18x4xbf16>
    %3 = vector.shape_cast %0 : vector<18x4xbf16> to vector<18x1x4xbf16>
    tpu.vector_store %arg9[%c0, %c0_0, %c0_1], %3 {strides = array<i32>} : memref<18x18x4xbf16, #tpu.memory_space<vmem>>, vector<18x1x4xbf16>,
    %c0_2 = arith.constant 0 : index
    %c17 = arith.constant 17 : index
    %c0_3 = arith.constant 0 : index
    %4 = vector.load %arg9[%c0_2, %c17, %c0_3] : memref<18x18x4xbf16, #tpu.memory_space<vmem>>, vector<18x1x4xbf16>
    %5 = vector.shape_cast %4 : vector<18x1x4xbf16> to vector<18x4xbf16>
    %6 = vector.shape_cast %0 : vector<18x4xbf16> to vector<18x1x4xbf16>
    tpu.vector_store %arg9[%c0_2, %c17, %c0_3], %6 {strides = array<i32>} : memref<18x18x4xbf16, #tpu.memory_space<vmem>>, vector<18x1x4xbf16>,
    %c0_4 = arith.constant 0 : index
    %c0_5 = arith.constant 0 : index
    %c0_6 = arith.constant 0 : index
    %c0_7 = arith.constant 0 : index
    %7 = vector.load %arg3[%c0_4, %c0_5, %c0_6, %c0_7] : memref<1x16x16x4xbf16, #tpu.memory_space<vmem>>, vector<1x16x16x4xbf16>
    %8 = vector.shape_cast %7 : vector<1x16x16x4xbf16> to vector<16x16x4xbf16>
    %c1 = arith.constant 1 : index
    %c1_8 = arith.constant 1 : index
    %c0_9 = arith.constant 0 : index
    %9 = vector.load %arg9[%c1, %c1_8, %c0_9] : memref<18x18x4xbf16, #tpu.memory_space<vmem>>, vector<16x16x4xbf16>
    tpu.vector_store %arg9[%c1, %c1_8, %c0_9], %8 {strides = array<i32>} : memref<18x18x4xbf16, #tpu.memory_space<vmem>>, vector<16x16x4xbf16>,
    %c0_10 = arith.constant 0 : index
    %c0_11 = arith.constant 0 : index
    %c0_12 = arith.constant 0 : index
    %c0_13 = arith.constant 0 : index
    %10 = vector.load %arg4[%c0_10, %c0_11, %c0_12, %c0_13] : memref<1x1x16x4xbf16, #tpu.memory_space<vmem>>, vector<1x1x16x4xbf16>
    %11 = vector.shape_cast %10 : vector<1x1x16x4xbf16> to vector<16x4xbf16>
    %c0_14 = arith.constant 0 : index
    %c0_15 = arith.constant 0 : index
    %c0_16 = arith.constant 0 : index
    %c0_17 = arith.constant 0 : index
    %12 = vector.load %arg5[%c0_14, %c0_15, %c0_16, %c0_17] : memref<1x1x16x4xbf16, #tpu.memory_space<vmem>>, vector<1x1x16x4xbf16>
    %13 = vector.shape_cast %12 : vector<1x1x16x4xbf16> to vector<16x4xbf16>
    %c0_i32 = arith.constant 0 : i32
    %14 = arith.cmpi sgt, %arg2, %c0_i32 : i32
    %cst_18 = arith.constant 0.000000e+00 : bf16
    %15 = vector.broadcast %cst_18 : bf16 to vector<16x4xbf16>
    %16 = arith.select %14, %11, %15 : vector<16x4xbf16>
    %c0_19 = arith.constant 0 : index
    %c1_20 = arith.constant 1 : index
    %c0_21 = arith.constant 0 : index
    %17 = vector.load %arg9[%c0_19, %c1_20, %c0_21] : memref<18x18x4xbf16, #tpu.memory_space<vmem>>, vector<1x16x4xbf16>
    %18 = vector.shape_cast %17 : vector<1x16x4xbf16> to vector<16x4xbf16>
    %19 = vector.shape_cast %16 : vector<16x4xbf16> to vector<1x16x4xbf16>
    tpu.vector_store %arg9[%c0_19, %c1_20, %c0_21], %19 {strides = array<i32>} : memref<18x18x4xbf16, #tpu.memory_space<vmem>>, vector<1x16x4xbf16>,
    %c0_i32_22 = arith.constant 0 : i32
    %20 = arith.cmpi slt, %arg2, %c0_i32_22 : i32
    %cst_23 = arith.constant 0.000000e+00 : bf16
    %21 = vector.broadcast %cst_23 : bf16 to vector<16x4xbf16>
    %22 = arith.select %20, %13, %21 : vector<16x4xbf16>
    %c17_24 = arith.constant 17 : index
    %c1_25 = arith.constant 1 : index
    %c0_26 = arith.constant 0 : index
    %23 = vector.load %arg9[%c17_24, %c1_25, %c0_26] : memref<18x18x4xbf16, #tpu.memory_space<vmem>>, vector<1x16x4xbf16>
    %24 = vector.shape_cast %23 : vector<1x16x4xbf16> to vector<16x4xbf16>
    %25 = vector.shape_cast %22 : vector<16x4xbf16> to vector<1x16x4xbf16>
    tpu.vector_store %arg9[%c17_24, %c1_25, %c0_26], %25 {strides = array<i32>} : memref<18x18x4xbf16, #tpu.memory_space<vmem>>, vector<1x16x4xbf16>,
    %c0_27 = arith.constant 0 : index
    %c0_28 = arith.constant 0 : index
    %c0_29 = arith.constant 0 : index
    %26 = vector.load %arg9[%c0_27, %c0_28, %c0_29] : memref<18x18x4xbf16, #tpu.memory_space<vmem>>, vector<16x16x4xbf16>
    %c0_30 = arith.constant 0 : index
    %c1_31 = arith.constant 1 : index
    %c0_32 = arith.constant 0 : index
    %27 = vector.load %arg9[%c0_30, %c1_31, %c0_32] : memref<18x18x4xbf16, #tpu.memory_space<vmem>>, vector<16x16x4xbf16>
    %c0_33 = arith.constant 0 : index
    %c2 = arith.constant 2 : index
    %c0_34 = arith.constant 0 : index
    %28 = vector.load %arg9[%c0_33, %c2, %c0_34] : memref<18x18x4xbf16, #tpu.memory_space<vmem>>, vector<16x16x4xbf16>
    %c1_35 = arith.constant 1 : index
    %c0_36 = arith.constant 0 : index
    %c0_37 = arith.constant 0 : index
    %29 = vector.load %arg9[%c1_35, %c0_36, %c0_37] : memref<18x18x4xbf16, #tpu.memory_space<vmem>>, vector<16x16x4xbf16>
    %c1_38 = arith.constant 1 : index
    %c1_39 = arith.constant 1 : index
    %c0_40 = arith.constant 0 : index
    %30 = vector.load %arg9[%c1_38, %c1_39, %c0_40] : memref<18x18x4xbf16, #tpu.memory_space<vmem>>, vector<16x16x4xbf16>
    %c1_41 = arith.constant 1 : index
    %c2_42 = arith.constant 2 : index
    %c0_43 = arith.constant 0 : index
    %31 = vector.load %arg9[%c1_41, %c2_42, %c0_43] : memref<18x18x4xbf16, #tpu.memory_space<vmem>>, vector<16x16x4xbf16>
    %c2_44 = arith.constant 2 : index
    %c0_45 = arith.constant 0 : index
    %c0_46 = arith.constant 0 : index
    %32 = vector.load %arg9[%c2_44, %c0_45, %c0_46] : memref<18x18x4xbf16, #tpu.memory_space<vmem>>, vector<16x16x4xbf16>
    %c2_47 = arith.constant 2 : index
    %c1_48 = arith.constant 1 : index
    %c0_49 = arith.constant 0 : index
    %33 = vector.load %arg9[%c2_47, %c1_48, %c0_49] : memref<18x18x4xbf16, #tpu.memory_space<vmem>>, vector<16x16x4xbf16>
    %c2_50 = arith.constant 2 : index
    %c2_51 = arith.constant 2 : index
    %c0_52 = arith.constant 0 : index
    %34 = vector.load %arg9[%c2_50, %c2_51, %c0_52] : memref<18x18x4xbf16, #tpu.memory_space<vmem>>, vector<16x16x4xbf16>
    %35 = tpu.concatenate %26, %27, %28, %29, %30, %31, %32, %33, %34 in 2 : vector<16x16x4xbf16>, vector<16x16x4xbf16>, vector<16x16x4xbf16>, vector<16x16x4xbf16>, vector<16x16x4xbf16>, vector<16x16x4xbf16>, vector<16x16x4xbf16>, vector<16x16x4xbf16>, vector<16x16x4xbf16> -> vector<16x16x36xbf16>
    %36 = vector.shape_cast %35 : vector<16x16x36xbf16> to vector<256x36xbf16>
    %c0_53 = arith.constant 0 : index
    %c0_54 = arith.constant 0 : index
    %37 = vector.load %arg6[%c0_53, %c0_54] : memref<36x8xbf16, #tpu.memory_space<vmem>>, vector<36x8xbf16>
    %cst_55 = arith.constant dense<0.000000e+00> : vector<256x8xf32>
    %38 = tpu.matmul %36, %37, %cst_55 {dimension_numbers = #tpu.dot_dimension_numbers<[1], [0], [0], [1], [0, 0, 1, 1], [], []>} : vector<256x36xbf16>, vector<36x8xbf16>, vector<256x8xf32> -> vector<256x8xf32>
    %c0_56 = arith.constant 0 : index
    %c0_57 = arith.constant 0 : index
    %39 = vector.load %arg7[%c0_56, %c0_57] : memref<1x8xf32, #tpu.memory_space<vmem>>, vector<1x8xf32>
    %40 = vector.broadcast %39 : vector<1x8xf32> to vector<256x8xf32>
    %41 = arith.addf %38, %40 : vector<256x8xf32>
    %cst_58 = arith.constant 0.000000e+00 : f32
    %42 = vector.broadcast %cst_58 : f32 to vector<256x8xf32>
    %43 = arith.maximumf %41, %42 : vector<256x8xf32>
    %44 = vector.shape_cast %43 : vector<256x8xf32> to vector<16x16x8xf32>
    %45 = arith.truncf %44 : vector<16x16x8xf32> to vector<16x16x8xbf16>
    %c0_59 = arith.constant 0 : index
    %c0_60 = arith.constant 0 : index
    %c0_61 = arith.constant 0 : index
    %c0_62 = arith.constant 0 : index
    %46 = vector.load %arg8[%c0_59, %c0_60, %c0_61, %c0_62] : memref<1x16x16x8xbf16, #tpu.memory_space<vmem>>, vector<1x16x16x8xbf16>
    %47 = vector.shape_cast %46 : vector<1x16x16x8xbf16> to vector<16x16x8xbf16>
    %48 = vector.shape_cast %45 : vector<16x16x8xbf16> to vector<1x16x16x8xbf16>
    tpu.vector_store %arg8[%c0_59, %c0_60, %c0_61, %c0_62], %48 {strides = array<i32>} : memref<1x16x16x8xbf16, #tpu.memory_space<vmem>>, vector<1x16x16x8xbf16>,
    return
  }
  func.func @transform_0(%arg0: i32, %arg1: i32, %arg2: i32) -> (i32, i32, i32, i32) {
    %c0_i32 = arith.constant 0 : i32
    %c0_i32_0 = arith.constant 0 : i32
    %c0_i32_1 = arith.constant 0 : i32
    return %arg0, %arg2, %c0_i32, %c0_i32_0 : i32, i32, i32, i32
  }
  func.func @transform_1(%arg0: i32, %arg1: i32, %arg2: i32) -> (i32, i32, i32, i32) {
    %c16_i32 = arith.constant 16 : i32
    %0 = arith.muli %arg2, %c16_i32 : i32
    %c1_i32 = arith.constant 1 : i32
    %1 = arith.subi %0, %c1_i32 : i32
    %c0_i32 = arith.constant 0 : i32
    %2 = arith.maxsi %1, %c0_i32 : i32
    %c0_i32_0 = arith.constant 0 : i32
    %c0_i32_1 = arith.constant 0 : i32
    %c0_i32_2 = arith.constant 0 : i32
    return %arg0, %2, %c0_i32_0, %c0_i32_1 : i32, i32, i32, i32
  }
  func.func @transform_2(%arg0: i32, %arg1: i32, %arg2: i32) -> (i32, i32, i32, i32) {
    %c1_i32 = arith.constant 1 : i32
    %0 = arith.addi %arg2, %c1_i32 : i32
    %c16_i32 = arith.constant 16 : i32
    %1 = arith.muli %0, %c16_i32 : i32
    %c15_i32 = arith.constant 15 : i32
    %2 = arith.minsi %1, %c15_i32 : i32
    %c0_i32 = arith.constant 0 : i32
    %c0_i32_0 = arith.constant 0 : i32
    %c0_i32_1 = arith.constant 0 : i32
    return %arg0, %2, %c0_i32, %c0_i32_0 : i32, i32, i32, i32
  }
  func.func @transform_3(%arg0: i32, %arg1: i32, %arg2: i32) -> (i32, i32) {
    %c0_i32 = arith.constant 0 : i32
    %c0_i32_0 = arith.constant 0 : i32
    return %c0_i32, %arg1 : i32, i32
  }
  func.func @transform_4(%arg0: i32, %arg1: i32, %arg2: i32) -> (i32, i32) {
    %c0_i32 = arith.constant 0 : i32
    %c0_i32_0 = arith.constant 0 : i32
    return %c0_i32, %arg1 : i32, i32
  }
  func.func @transform_5(%arg0: i32, %arg1: i32, %arg2: i32) -> (i32, i32, i32, i32) {
    %c0_i32 = arith.constant 0 : i32
    %c0_i32_0 = arith.constant 0 : i32
    return %arg0, %arg2, %c0_i32, %arg1 : i32, i32, i32, i32
  }
}

</mosaic_0001>

<llo_original>
// kernel: tpu_custom_call.1
$region0: #{tpu_custom_call.1}
  #allocation0 [shape = 'u32[]', space=smem, size = 0x4, offset = 0x4, fixed_abs, tag = 'smem constant byte address 0x4 - core index']
  #allocation1 [shape = 'u32[144,128]{1,0:T(1,128)}', space=vmem, size = 0x12000, scoped, tag = 'internal scratch']
  #allocation2 [shape = 'bf16[18,18,4]{2,1,0:T(8,128)(2,1)}', space=vmem, size = 0x1b000, scoped, tag = 'scratch operand']
  %s0 = inlined_call_operand.vmem [shape: bf16[2,16,16,4], index: 0, kind: input, shape index: {}]
  %s1 = inlined_call_operand.vmem [shape: bf16[2,16,16,4], index: 1, kind: input, shape index: {}]
  %s2 = inlined_call_operand.vmem [shape: bf16[2,16,16,4], index: 2, kind: input, shape index: {}]
  %s3 = inlined_call_operand.vmem [shape: bf16[36,8], index: 3, kind: input, shape index: {}]
  %s4 = inlined_call_operand.vmem [shape: f32[1,8], index: 4, kind: input, shape index: {}]
  %s5 = inlined_call_operand.vmem [shape: bf16[2,16,16,8], index: 5, kind: output, shape index: {}]
  %s6 = sld [smem:[#allocation0]]
  $region53: #{tpu_custom_call.1} parent=0
    _
  %s8 = ssub.s32 1, %s6
  %s9 = scalar_select 0, %s8, %s6
  loop: start=0, step=1, limit=4
  $region2: #{tpu_custom_call.1} parent=0 // loop_pre_header
    _
  $region3: #{tpu_custom_call.1} parent=0 // loop_header
    %s11 = sphi 0, %s15
    %p12 = scmp.ge.s32.totalorder %s11, 4
    %s18 = sphi 0, %s37
    %s19 = sphi 0, %s33
    %s20 = sphi 0, %s29
    %s21 = sphi 0, %s18
    %s22 = sphi 0, %s19
    %s23 = sphi 0, %s20
    %s24 = sphi 0, %s21
    %s25 = sphi 0, %s22
    %s26 = sphi 0, %s23
    %s42 = sphi 0, %s44
    %s45 = sphi 0, %s42
    %s46 = sphi 0, %s45
    %s62 = sphi 0, %s46
    %s78 = sphi 0, %s80
    %s81 = sphi 0, %s78
    %s82 = sphi 0, %s81
    %s98 = sphi 0, %s82
    %s114 = sphi 0, %s116
    %s117 = sphi 0, %s114
    %s118 = sphi 0, %s117
    %s134 = sphi 0, %s118
    %s140 = sphi 0, %s142
    %s143 = sphi 0, %s140
    %s144 = sphi 0, %s143
    %s160 = sphi 0, %s144
    %s166 = sphi 0, %s168
    %s169 = sphi 0, %s166
    %s170 = sphi 0, %s169
    %s186 = sphi 0, %s170
    %s196 = sphi 0, %s198
    %s199 = sphi 0, %s196
    %s200 = sphi 0, %s199
    %s216 = sphi 0, %s200
  $region4: #{tpu_custom_call.1} parent=0 // loop_header_branch
    %14 = sbr.rel (%p12) target = $region8
  $region5: #{tpu_custom_call.1} parent=0 // loop_body
    %s16 = ssub.s32 %s11, 1
    %s17 = ssub.s32 %s11, 2
    %s27 = sadd.s32 1, %s20
    %p28 = scmp.ge.s32.totalorder %s27, 1
    %s29 = scalar_select %p28, 0, %s27
    %s30 = sadd.s32 1, %s19
    %s31 = scalar_select %p28, %s30, %s19
    %p32 = scmp.ge.s32.totalorder %s31, 1
    %s33 = scalar_select %p32, 0, %s31
    %s34 = sadd.s32 1, %s18
    %s35 = scalar_select %p32, %s34, %s18
    %p36 = scmp.ge.s32.totalorder %s35, 2
    %s37 = scalar_select %p36, 0, %s35
    %s38 = ssub.s32 %s18, %s37
    %s39 = ssub.s32 %s20, %s29
    %s40 = sor.u32 %s38, %s39
    %p41 = scmp.eq.s32.totalorder %s40, 0
    %s43 = sadd.s32 %s42, 1
    %s44 = scalar_select %p41, %s42, %s43
    %p47 = pneg %p41
    %p48 = scmp.eq.s32.totalorder %s11, 1
    %p49 = por %p47, %p48
    %p50 = scmp.ne.s32.totalorder %s42, %s45
    %p51 = scmp.eq.s32.totalorder %s11, 0
    %p52 = por %p50, %p51
    %p53 = scmp.ne.s32.totalorder %s42, %s45
    %p54 = scmp.eq.s32.totalorder %s16, 1
    %p55 = por %p53, %p54
    %p56 = scmp.ne.s32.totalorder %s45, %s46
    %p57 = scmp.eq.s32.totalorder %s16, 0
    %p58 = por %p56, %p57
    %p59 = scmp.ne.s32.totalorder %s45, %s46
    %p60 = scmp.eq.s32.totalorder %s17, 1
    %p61 = por %p59, %p60
    %p63 = scmp.ne.s32.totalorder %s46, %s62
    %p64 = scmp.eq.s32.totalorder %s17, 0
    %p65 = por %p63, %p64
    %s66 = smul.u32 %s20, 16
    %s67 = ssub.s32 %s66, 1
    %p68 = scmp.gt.s32.totalorder %s67, 0
    %s69 = scalar_select %p68, %s67, 0
    %s70 = smul.u32 %s29, 16
    %s71 = ssub.s32 %s70, 1
    %p72 = scmp.gt.s32.totalorder %s71, 0
    %s73 = scalar_select %p72, %s71, 0
    %s74 = ssub.s32 %s18, %s37
    %s75 = ssub.s32 %s69, %s73
    %s76 = sor.u32 %s74, %s75
    %p77 = scmp.eq.s32.totalorder %s76, 0
    %s79 = sadd.s32 %s78, 1
    %s80 = scalar_select %p77, %s78, %s79
    %p83 = pneg %p77
    %p84 = scmp.eq.s32.totalorder %s11, 1
    %p85 = por %p83, %p84
    %p86 = scmp.ne.s32.totalorder %s78, %s81
    %p87 = scmp.eq.s32.totalorder %s11, 0
    %p88 = por %p86, %p87
    %p89 = scmp.ne.s32.totalorder %s78, %s81
    %p90 = scmp.eq.s32.totalorder %s16, 1
    %p91 = por %p89, %p90
    %p92 = scmp.ne.s32.totalorder %s81, %s82
    %p93 = scmp.eq.s32.totalorder %s16, 0
    %p94 = por %p92, %p93
    %p95 = scmp.ne.s32.totalorder %s81, %s82
    %p96 = scmp.eq.s32.totalorder %s17, 1
    %p97 = por %p95, %p96
    %p99 = scmp.ne.s32.totalorder %s82, %s98
    %p100 = scmp.eq.s32.totalorder %s17, 0
    %p101 = por %p99, %p100
    %s102 = sadd.s32 %s20, 1
    %s103 = smul.u32 %s102, 16
    %p104 = scmp.lt.s32.totalorder %s103, 15
    %s105 = scalar_select %p104, %s103, 15
    %s106 = sadd.s32 %s29, 1
    %s107 = smul.u32 %s106, 16
    %p108 = scmp.lt.s32.totalorder %s107, 15
    %s109 = scalar_select %p108, %s107, 15
    %s110 = ssub.s32 %s18, %s37
    %s111 = ssub.s32 %s105, %s109
    %s112 = sor.u32 %s110, %s111
    %p113 = scmp.eq.s32.totalorder %s112, 0
    %s115 = sadd.s32 %s114, 1
    %s116 = scalar_select %p113, %s114, %s115
    %p119 = pneg %p113
    %p120 = scmp.eq.s32.totalorder %s11, 1
    %p121 = por %p119, %p120
    %p122 = scmp.ne.s32.totalorder %s114, %s117
    %p123 = scmp.eq.s32.totalorder %s11, 0
    %p124 = por %p122, %p123
    %p125 = scmp.ne.s32.totalorder %s114, %s117
    %p126 = scmp.eq.s32.totalorder %s16, 1
    %p127 = por %p125, %p126
    %p128 = scmp.ne.s32.totalorder %s117, %s118
    %p129 = scmp.eq.s32.totalorder %s16, 0
    %p130 = por %p128, %p129
    %p131 = scmp.ne.s32.totalorder %s117, %s118
    %p132 = scmp.eq.s32.totalorder %s17, 1
    %p133 = por %p131, %p132
    %p135 = scmp.ne.s32.totalorder %s118, %s134
    %p136 = scmp.eq.s32.totalorder %s17, 0
    %p137 = por %p135, %p136
    %s138 = ssub.s32 %s19, %s33
    %p139 = scmp.eq.s32.totalorder %s138, 0
    %s141 = sadd.s32 %s140, 1
    %s142 = scalar_select %p139, %s140, %s141
    %p145 = pneg %p139
    %p146 = scmp.eq.s32.totalorder %s11, 1
    %p147 = por %p145, %p146
    %p148 = scmp.ne.s32.totalorder %s140, %s143
    %p149 = scmp.eq.s32.totalorder %s11, 0
    %p150 = por %p148, %p149
    %p151 = scmp.ne.s32.totalorder %s140, %s143
    %p152 = scmp.eq.s32.totalorder %s16, 1
    %p153 = por %p151, %p152
    %p154 = scmp.ne.s32.totalorder %s143, %s144
    %p155 = scmp.eq.s32.totalorder %s16, 0
    %p156 = por %p154, %p155
    %p157 = scmp.ne.s32.totalorder %s143, %s144
    %p158 = scmp.eq.s32.totalorder %s17, 1
    %p159 = por %p157, %p158
    %p161 = scmp.ne.s32.totalorder %s144, %s160
    %p162 = scmp.eq.s32.totalorder %s17, 0
    %p163 = por %p161, %p162
    %s164 = ssub.s32 %s19, %s33
    %p165 = scmp.eq.s32.totalorder %s164, 0
    %s167 = sadd.s32 %s166, 1
    %s168 = scalar_select %p165, %s166, %s167
    %p171 = pneg %p165
    %p172 = scmp.eq.s32.totalorder %s11, 1
    %p173 = por %p171, %p172
    %p174 = scmp.ne.s32.totalorder %s166, %s169
    %p175 = scmp.eq.s32.totalorder %s11, 0
    %p176 = por %p174, %p175
    %p177 = scmp.ne.s32.totalorder %s166, %s169
    %p178 = scmp.eq.s32.totalorder %s16, 1
    %p179 = por %p177, %p178
    %p180 = scmp.ne.s32.totalorder %s169, %s170
    %p181 = scmp.eq.s32.totalorder %s16, 0
    %p182 = por %p180, %p181
    %p183 = scmp.ne.s32.totalorder %s169, %s170
    %p184 = scmp.eq.s32.totalorder %s17, 1
    %p185 = por %p183, %p184
    %p187 = scmp.ne.s32.totalorder %s170, %s186
    %p188 = scmp.eq.s32.totalorder %s17, 0
    %p189 = por %p187, %p188
    %s190 = ssub.s32 %s18, %s37
    %s191 = ssub.s32 %s20, %s29
    %s192 = sor.u32 %s190, %s191
    %s193 = ssub.s32 %s19, %s33
    %s194 = sor.u32 %s192, %s193
    %p195 = scmp.eq.s32.totalorder %s194, 0
    %s197 = sadd.s32 %s196, 1
    %s198 = scalar_select %p195, %s196, %s197
    %p201 = pneg %p195
    %p202 = scmp.eq.s32.totalorder %s11, 1
    %p203 = por %p201, %p202
    %p204 = scmp.ne.s32.totalorder %s196, %s199
    %p205 = scmp.eq.s32.totalorder %s11, 0
    %p206 = por %p204, %p205
    %p207 = scmp.ne.s32.totalorder %s196, %s199
    %p208 = scmp.eq.s32.totalorder %s16, 1
    %p209 = por %p207, %p208
    %p210 = scmp.ne.s32.totalorder %s199, %s200
    %p211 = scmp.eq.s32.totalorder %s16, 0
    %p212 = por %p210, %p211
    %p213 = scmp.ne.s32.totalorder %s199, %s200
    %p214 = scmp.eq.s32.totalorder %s17, 1
    %p215 = por %p213, %p214
    %p217 = scmp.ne.s32.totalorder %s200, %s216
    %p218 = scmp.eq.s32.totalorder %s17, 0
    %p219 = por %p217, %p218
    %p220 = scmp.le.s32.totalorder 1, %s11
    %p221 = scmp.lt.s32.totalorder %s11, 3
    %p222 = pnand %p220, %p221
    %p223 = pneg %p222
    // Predicated region
    $region9: #{tpu_custom_call.1} parent=5 // pred_check
      _
    $region10: #{tpu_custom_call.1} parent=5 // pred_check_branch
      %225 = sbr.rel (%p222) target = $region12
    $region11: #{tpu_custom_call.1} parent=5 // pred_region
      %s226 = ssub.s32 %s11, 1
      // Predicated region
      $region13: #{tpu_custom_call.1} parent=11 // pred_check
        %p227 = pneg %p156
      $region14: #{tpu_custom_call.1} parent=11 // pred_check_branch
        %229 = sbr.rel (%p227) target = $region16
      $region15: #{tpu_custom_call.1} parent=11 // pred_region
        %p230 = scmp.lt.s32.totalorder %s22, 0
        %s231 = scalar_select %p230, %s22, 0
        %s232 = smul.addr %s231, 4
        %s233 = scalar_lea.vmem %s3, %s232
      $region16: #{tpu_custom_call.1} parent=11 // pred_fallthru
        _
      // Predicated region
      $region17: #{tpu_custom_call.1} parent=11 // pred_check
        %p234 = pneg %p182
      $region18: #{tpu_custom_call.1} parent=11 // pred_check_branch
        %236 = sbr.rel (%p234) target = $region20
      $region19: #{tpu_custom_call.1} parent=11 // pred_region
        %p237 = scmp.lt.s32.totalorder %s22, 0
        %s238 = scalar_select %p237, %s22, 0
        %s239 = scalar_lea.vmem %s4, %s238
      $region20: #{tpu_custom_call.1} parent=11 // pred_fallthru
        _
    $region12: #{tpu_custom_call.1} parent=5 // pred_fallthru
      _
    %p240 = scmp.lt.s32.totalorder %s11, 2
    // Predicated region
    $region21: #{tpu_custom_call.1} parent=5 // pred_check
      %p241 = pneg %p240
    $region22: #{tpu_custom_call.1} parent=5 // pred_check_branch
      %243 = sbr.rel (%p241) target = $region24
    $region23: #{tpu_custom_call.1} parent=5 // pred_region
      // Predicated region
      $region25: #{tpu_custom_call.1} parent=23 // pred_check
        %p244 = pneg %p52
      $region26: #{tpu_custom_call.1} parent=23 // pred_check_branch
        %246 = sbr.rel (%p244) target = $region28
      $region27: #{tpu_custom_call.1} parent=23 // pred_region
        %s247 = smul.u32 16, %s20
        %p248 = scmp.lt.s32.totalorder %s18, 1
        %s249 = scalar_select %p248, %s18, 1
        %p250 = scmp.lt.s32.totalorder %s247, 15
        %s251 = scalar_select %p250, %s247, 15
        %s252 = smul.addr %s251, 2
        %s253 = smul.addr %s249, 32
        %s254 = sadd.s32 %s252, %s253
        %s255 = smul.addr %s254, 4
        %s256 = scalar_lea.vmem %s0, %s255
        %s257 = smul.u32 16, %s20
      $region28: #{tpu_custom_call.1} parent=23 // pred_fallthru
        _
      // Predicated region
      $region29: #{tpu_custom_call.1} parent=23 // pred_check
        %p258 = pneg %p88
      $region30: #{tpu_custom_call.1} parent=23 // pred_check_branch
        %260 = sbr.rel (%p258) target = $region32
      $region31: #{tpu_custom_call.1} parent=23 // pred_region
        %s261 = smul.u32 %s20, 16
        %s262 = ssub.s32 %s261, 1
        %p263 = scmp.gt.s32.totalorder %s262, 0
        %s264 = scalar_select %p263, %s262, 0
        %p265 = scmp.lt.s32.totalorder %s18, 1
        %s266 = scalar_select %p265, %s18, 1
        %p267 = scmp.lt.s32.totalorder %s264, 15
        %s268 = scalar_select %p267, %s264, 15
        %s269 = smul.addr %s268, 2
        %s270 = smul.addr %s266, 32
        %s271 = sadd.s32 %s269, %s270
        %s272 = smul.addr %s271, 4
        %s273 = scalar_lea.vmem %s1, %s272
        %s274 = smul.u32 %s20, 16
        %s275 = ssub.s32 %s274, 1
        %p276 = scmp.gt.s32.totalorder %s275, 0
        %s277 = scalar_select %p276, %s275, 0
      $region32: #{tpu_custom_call.1} parent=23 // pred_fallthru
        _
      // Predicated region
      $region33: #{tpu_custom_call.1} parent=23 // pred_check
        %p278 = pneg %p124
      $region34: #{tpu_custom_call.1} parent=23 // pred_check_branch
        %280 = sbr.rel (%p278) target = $region36
      $region35: #{tpu_custom_call.1} parent=23 // pred_region
        %s281 = sadd.s32 %s20, 1
        %s282 = smul.u32 %s281, 16
        %p283 = scmp.lt.s32.totalorder %s282, 15
        %s284 = scalar_select %p283, %s282, 15
        %p285 = scmp.lt.s32.totalorder %s18, 1
        %s286 = scalar_select %p285, %s18, 1
        %p287 = scmp.lt.s32.totalorder %s284, 15
        %s288 = scalar_select %p287, %s284, 15
        %s289 = smul.addr %s288, 2
        %s290 = smul.addr %s286, 32
        %s291 = sadd.s32 %s289, %s290
        %s292 = smul.addr %s291, 4
        %s293 = scalar_lea.vmem %s2, %s292
        %s294 = sadd.s32 %s20, 1
        %s295 = smul.u32 %s294, 16
        %p296 = scmp.lt.s32.totalorder %s295, 15
        %s297 = scalar_select %p296, %s295, 15
      $region36: #{tpu_custom_call.1} parent=23 // pred_fallthru
        _
    $region24: #{tpu_custom_call.1} parent=5 // pred_fallthru
      _
    %p298 = scmp.le.s32.totalorder 1, %s11
    %p299 = scmp.lt.s32.totalorder %s11, 3
    %p300 = pnand %p298, %p299
    %p301 = pneg %p300
    // Predicated region
    $region37: #{tpu_custom_call.1} parent=5 // pred_check
      _
    $region38: #{tpu_custom_call.1} parent=5 // pred_check_branch
      %303 = sbr.rel (%p300) target = $region40
    $region39: #{tpu_custom_call.1} parent=5 // pred_region
      %s304 = ssub.s32 %s11, 1
      %s305 = smul.u32 16, %s23
      %p306 = scmp.lt.s32.totalorder %s21, 1
      %s307 = scalar_select %p306, %s21, 1
      %p308 = scmp.lt.s32.totalorder %s305, 15
      %s309 = scalar_select %p308, %s305, 15
      %s310 = smul.addr %s309, 2
      %s311 = smul.addr %s307, 32
      %s312 = sadd.s32 %s310, %s311
      %s313 = smul.addr %s312, 4
      %s314 = scalar_lea.vmem %s0, %s313
      %p315 = pneg %p58
      %p316 = pneg %p55
      %s317 = smul.u32 %s23, 16
      %s318 = ssub.s32 %s317, 1
      %p319 = scmp.gt.s32.totalorder %s318, 0
      %s320 = scalar_select %p319, %s318, 0
      %p321 = scmp.lt.s32.totalorder %s21, 1
      %s322 = scalar_select %p321, %s21, 1
      %p323 = scmp.lt.s32.totalorder %s320, 15
      %s324 = scalar_select %p323, %s320, 15
      %s325 = smul.addr %s324, 2
      %s326 = smul.addr %s322, 32
      %s327 = sadd.s32 %s325, %s326
      %s328 = smul.addr %s327, 4
      %s329 = scalar_lea.vmem %s1, %s328
      %p330 = pneg %p94
      %p331 = pneg %p91
      %s332 = sadd.s32 %s23, 1
      %s333 = smul.u32 %s332, 16
      %p334 = scmp.lt.s32.totalorder %s333, 15
      %s335 = scalar_select %p334, %s333, 15
      %p336 = scmp.lt.s32.totalorder %s21, 1
      %s337 = scalar_select %p336, %s21, 1
      %p338 = scmp.lt.s32.totalorder %s335, 15
      %s339 = scalar_select %p338, %s335, 15
      %s340 = smul.addr %s339, 2
      %s341 = smul.addr %s337, 32
      %s342 = sadd.s32 %s340, %s341
      %s343 = smul.addr %s342, 4
      %s344 = scalar_lea.vmem %s2, %s343
      %p345 = pneg %p130
      %p346 = pneg %p127
      %p347 = scmp.lt.s32.totalorder %s22, 0
      %s348 = scalar_select %p347, %s22, 0
      %s349 = smul.addr %s348, 4
      %s350 = scalar_lea.vmem %s3, %s349
      %p351 = pneg %p156
      %p352 = pneg %p153
      %p353 = scmp.lt.s32.totalorder %s22, 0
      %s354 = scalar_select %p353, %s22, 0
      %s355 = scalar_lea.vmem %s4, %s354
      %p356 = pneg %p182
      %p357 = pneg %p179
      %p358 = pneg %p212
      %p359 = pneg %p209
      %s360 = smul.u32 16, %s23
      %p361 = scmp.lt.s32.totalorder %s21, 1
      %s362 = scalar_select %p361, %s21, 1
      %p363 = scmp.lt.s32.totalorder %s360, 15
      %s364 = scalar_select %p363, %s360, 15
      %p365 = scmp.lt.s32.totalorder %s22, 0
      %s366 = scalar_select %p365, %s22, 0
      %s367 = smul.addr %s364, 2
      %s368 = sadd.s32 %s366, %s367
      %s369 = smul.addr %s362, 32
      %s370 = sadd.s32 %s368, %s369
      %s371 = smul.addr %s370, 4
      %s372 = scalar_lea.vmem %s5, %s371
      %s373 = smul.u32 16, %s23
      %p374 = scmp.lt.s32.totalorder %s21, 1
      %s375 = scalar_select %p374, %s21, 1
      %p376 = scmp.lt.s32.totalorder %s373, 15
      %s377 = scalar_select %p376, %s373, 15
      %s378 = smul.addr %s377, 2
      %s379 = smul.addr %s375, 32
      %s380 = sadd.s32 %s378, %s379
      %s381 = smul.addr %s380, 4
      %s382 = scalar_lea.vmem %s0, %s381
      %s383 = smul.u32 16, %s23
      %s384 = smul.u32 %s23, 16
      %s385 = ssub.s32 %s384, 1
      %p386 = scmp.gt.s32.totalorder %s385, 0
      %s387 = scalar_select %p386, %s385, 0
      %p388 = scmp.lt.s32.totalorder %s21, 1
      %s389 = scalar_select %p388, %s21, 1
      %p390 = scmp.lt.s32.totalorder %s387, 15
      %s391 = scalar_select %p390, %s387, 15
      %s392 = smul.addr %s391, 2
      %s393 = smul.addr %s389, 32
      %s394 = sadd.s32 %s392, %s393
      %s395 = smul.addr %s394, 4
      %s396 = scalar_lea.vmem %s1, %s395
      %s397 = smul.u32 %s23, 16
      %s398 = ssub.s32 %s397, 1
      %p399 = scmp.gt.s32.totalorder %s398, 0
      %s400 = scalar_select %p399, %s398, 0
      %s401 = sadd.s32 %s23, 1
      %s402 = smul.u32 %s401, 16
      %p403 = scmp.lt.s32.totalorder %s402, 15
      %s404 = scalar_select %p403, %s402, 15
      %p405 = scmp.lt.s32.totalorder %s21, 1
      %s406 = scalar_select %p405, %s21, 1
      %p407 = scmp.lt.s32.totalorder %s404, 15
      %s408 = scalar_select %p407, %s404, 15
      %s409 = smul.addr %s408, 2
      %s410 = smul.addr %s406, 32
      %s411 = sadd.s32 %s409, %s410
      %s412 = smul.addr %s411, 4
      %s413 = scalar_lea.vmem %s2, %s412
      %s414 = sadd.s32 %s23, 1
      %s415 = smul.u32 %s414, 16
      %p416 = scmp.lt.s32.totalorder %s415, 15
      %s417 = scalar_select %p416, %s415, 15
      %p418 = scmp.lt.s32.totalorder %s22, 0
      %s419 = scalar_select %p418, %s22, 0
      %s420 = smul.addr %s419, 4
      %s421 = scalar_lea.vmem %s3, %s420
      %p422 = scmp.lt.s32.totalorder %s22, 0
      %s423 = scalar_select %p422, %s22, 0
      %s424 = scalar_lea.vmem %s4, %s423
      %s425 = smul.u32 16, %s23
      %p426 = scmp.lt.s32.totalorder %s21, 1
      %s427 = scalar_select %p426, %s21, 1
      %p428 = scmp.lt.s32.totalorder %s425, 15
      %s429 = scalar_select %p428, %s425, 15
      %p430 = scmp.lt.s32.totalorder %s22, 0
      %s431 = scalar_select %p430, %s22, 0
      %s432 = smul.addr %s429, 2
      %s433 = sadd.s32 %s431, %s432
      %s434 = smul.addr %s427, 32
      %s435 = sadd.s32 %s433, %s434
      %s436 = smul.addr %s435, 4
      %s437 = scalar_lea.vmem %s5, %s436
      %s438 = smul.u32 16, %s23
      %vm440 = vcmask 24576
      %vm441 = vsmask.f32 256
      %vm442 = vmand %vm440, %vm441
      %v443 = vld [vmem:[#allocation2] sm:$0x1]
      %v444 = vsel %vm442, 0, %v443
      %445 = vst [vmem:[#allocation2] sm:$0x1] %v444
      %v446 = vld [vmem:[#allocation2 + $0xc] sm:$0x1]
      %v447 = vsel %vm442, 0, %v446
      %448 = vst [vmem:[#allocation2 + $0xc] sm:$0x1] %v447
      %v449 = vld [vmem:[#allocation2 + $0x18] sm:$0x1]
      %v450 = vsel %vm442, 0, %v449
      %451 = vst [vmem:[#allocation2 + $0x18] sm:$0x1] %v450
      %v452 = vld [vmem:[#allocation2 + $0x24] sm:$0x1]
      %v453 = vsel %vm442, 0, %v452
      %454 = vst [vmem:[#allocation2 + $0x24] sm:$0x1] %v453
      %v455 = vld [vmem:[#allocation2 + $0x30] sm:$0x1]
      %v456 = vsel %vm442, 0, %v455
      %457 = vst [vmem:[#allocation2 + $0x30] sm:$0x1] %v456
      %v458 = vld [vmem:[#allocation2 + $0x3c] sm:$0x1]
      %v459 = vsel %vm442, 0, %v458
      %460 = vst [vmem:[#allocation2 + $0x3c] sm:$0x1] %v459
      %v461 = vld [vmem:[#allocation2 + $0x48] sm:$0x1]
      %v462 = vsel %vm442, 0, %v461
      %463 = vst [vmem:[#allocation2 + $0x48] sm:$0x1] %v462
      %v464 = vld [vmem:[#allocation2 + $0x54] sm:$0x1]
      %v465 = vsel %vm442, 0, %v464
      %466 = vst [vmem:[#allocation2 + $0x54] sm:$0x1] %v465
      %v467 = vld [vmem:[#allocation2 + $0x60] sm:$0x1]
      %v468 = vsel %vm442, 0, %v467
      %469 = vst [vmem:[#allocation2 + $0x60] sm:$0x1] %v468
      %v470 = vld [vmem:[#allocation2 + $0x6c] sm:$0x1]
      %v471 = vsel %vm442, 0, %v470
      %472 = vst [vmem:[#allocation2 + $0x6c] sm:$0x1] %v471
      %v473 = vld [vmem:[#allocation2 + $0x78] sm:$0x1]
      %v474 = vsel %vm442, 0, %v473
      %475 = vst [vmem:[#allocation2 + $0x78] sm:$0x1] %v474
      %v476 = vld [vmem:[#allocation2 + $0x84] sm:$0x1]
      %v477 = vsel %vm442, 0, %v476
      %478 = vst [vmem:[#allocation2 + $0x84] sm:$0x1] %v477
      %v479 = vld [vmem:[#allocation2 + $0x90] sm:$0x1]
      %v480 = vsel %vm442, 0, %v479
      %481 = vst [vmem:[#allocation2 + $0x90] sm:$0x1] %v480
      %v482 = vld [vmem:[#allocation2 + $0x9c] sm:$0x1]
      %v483 = vsel %vm442, 0, %v482
      %484 = vst [vmem:[#allocation2 + $0x9c] sm:$0x1] %v483
      %v485 = vld [vmem:[#allocation2 + $0xa8] sm:$0x1]
      %v486 = vsel %vm442, 0, %v485
      %487 = vst [vmem:[#allocation2 + $0xa8] sm:$0x1] %v486
      %v488 = vld [vmem:[#allocation2 + $0xb4] sm:$0x1]
      %v489 = vsel %vm442, 0, %v488
      %490 = vst [vmem:[#allocation2 + $0xb4] sm:$0x1] %v489
      %v491 = vld [vmem:[#allocation2 + $0xc0] sm:$0x1]
      %v492 = vsel %vm442, 0, %v491
      %493 = vst [vmem:[#allocation2 + $0xc0] sm:$0x1] %v492
      %v494 = vld [vmem:[#allocation2 + $0xcc] sm:$0x1]
      %v495 = vsel %vm442, 0, %v494
      %496 = vst [vmem:[#allocation2 + $0xcc] sm:$0x1] %v495
      %vm497 = vsmask.f32 7938
      %vm498 = vmand %vm440, %vm497
      %v499 = vld [vmem:[#allocation2 + $0x8] sm:$0x1]
      %v500 = vsel %vm498, 0, %v499
      %501 = vst [vmem:[#allocation2 + $0x8] sm:$0x1] %v500
      %v502 = vld [vmem:[#allocation2 + $0x14] sm:$0x1]
      %v503 = vsel %vm498, 0, %v502
      %504 = vst [vmem:[#allocation2 + $0x14] sm:$0x1] %v503
      %v505 = vld [vmem:[#allocation2 + $0x20] sm:$0x1]
      %v506 = vsel %vm498, 0, %v505
      %507 = vst [vmem:[#allocation2 + $0x20] sm:$0x1] %v506
      %v508 = vld [vmem:[#allocation2 + $0x2c] sm:$0x1]
      %v509 = vsel %vm498, 0, %v508
      %510 = vst [vmem:[#allocation2 + $0x2c] sm:$0x1] %v509
      %v511 = vld [vmem:[#allocation2 + $0x38] sm:$0x1]
      %v512 = vsel %vm498, 0, %v511
      %513 = vst [vmem:[#allocation2 + $0x38] sm:$0x1] %v512
      %v514 = vld [vmem:[#allocation2 + $0x44] sm:$0x1]
      %v515 = vsel %vm498, 0, %v514
      %516 = vst [vmem:[#allocation2 + $0x44] sm:$0x1] %v515
      %v517 = vld [vmem:[#allocation2 + $0x50] sm:$0x1]
      %v518 = vsel %vm498, 0, %v517
      %519 = vst [vmem:[#allocation2 + $0x50] sm:$0x1] %v518
      %v520 = vld [vmem:[#allocation2 + $0x5c] sm:$0x1]
      %v521 = vsel %vm498, 0, %v520
      %522 = vst [vmem:[#allocation2 + $0x5c] sm:$0x1] %v521
      %v523 = vld [vmem:[#allocation2 + $0x68] sm:$0x1]
      %v524 = vsel %vm498, 0, %v523
      %525 = vst [vmem:[#allocation2 + $0x68] sm:$0x1] %v524
      %v526 = vld [vmem:[#allocation2 + $0x74] sm:$0x1]
      %v527 = vsel %vm498, 0, %v526
      %528 = vst [vmem:[#allocation2 + $0x74] sm:$0x1] %v527
      %v529 = vld [vmem:[#allocation2 + $0x80] sm:$0x1]
      %v530 = vsel %vm498, 0, %v529
      %531 = vst [vmem:[#allocation2 + $0x80] sm:$0x1] %v530
      %v532 = vld [vmem:[#allocation2 + $0x8c] sm:$0x1]
      %v533 = vsel %vm498, 0, %v532
      %534 = vst [vmem:[#allocation2 + $0x8c] sm:$0x1] %v533
      %v535 = vld [vmem:[#allocation2 + $0x98] sm:$0x1]
      %v536 = vsel %vm498, 0, %v535
      %537 = vst [vmem:[#allocation2 + $0x98] sm:$0x1] %v536
      %v538 = vld [vmem:[#allocation2 + $0xa4] sm:$0x1]
      %v539 = vsel %vm498, 0, %v538
      %540 = vst [vmem:[#allocation2 + $0xa4] sm:$0x1] %v539
      %v541 = vld [vmem:[#allocation2 + $0xb0] sm:$0x1]
      %v542 = vsel %vm498, 0, %v541
      %543 = vst [vmem:[#allocation2 + $0xb0] sm:$0x1] %v542
      %v544 = vld [vmem:[#allocation2 + $0xbc] sm:$0x1]
      %v545 = vsel %vm498, 0, %v544
      %546 = vst [vmem:[#allocation2 + $0xbc] sm:$0x1] %v545
      %v547 = vld [vmem:[#allocation2 + $0xc8] sm:$0x1]
      %v548 = vsel %vm498, 0, %v547
      %549 = vst [vmem:[#allocation2 + $0xc8] sm:$0x1] %v548
      %v550 = vld [vmem:[#allocation2 + $0xd4] sm:$0x1]
      %v551 = vsel %vm498, 0, %v550
      %552 = vst [vmem:[#allocation2 + $0xd4] sm:$0x1] %v551
      %v553 = vld [vmem:[%s382] sm:$0xf]
      %v554 = vld [vmem:[%s382 + $0x4] sm:$0xf]
      %v555 = vld [vmem:[%s382 + $0x8] sm:$0xf]
      %v556 = vld [vmem:[%s382 + $0xc] sm:$0xf]
      %v557 = vld [vmem:[%s382 + $0x10] sm:$0xf]
      %v558 = vld [vmem:[%s382 + $0x14] sm:$0xf]
      %v559 = vld [vmem:[%s382 + $0x18] sm:$0xf]
      %v560 = vld [vmem:[%s382 + $0x1c] sm:$0xf]
      %v561 = vld [vmem:[%s382 + $0x20] sm:$0xf]
      %v562 = vld [vmem:[%s382 + $0x24] sm:$0xf]
      %v563 = vld [vmem:[%s382 + $0x28] sm:$0xf]
      %v564 = vld [vmem:[%s382 + $0x2c] sm:$0xf]
      %v565 = vld [vmem:[%s382 + $0x30] sm:$0xf]
      %v566 = vld [vmem:[%s382 + $0x34] sm:$0xf]
      %v567 = vld [vmem:[%s382 + $0x38] sm:$0xf]
      %v568 = vld [vmem:[%s382 + $0x3c] sm:$0xf]
      %v569 = vld [vmem:[%s382 + $0x40] sm:$0xf]
      %v570 = vld [vmem:[%s382 + $0x44] sm:$0xf]
      %v571 = vld [vmem:[%s382 + $0x48] sm:$0xf]
      %v572 = vld [vmem:[%s382 + $0x4c] sm:$0xf]
      %v573 = vld [vmem:[%s382 + $0x50] sm:$0xf]
      %v574 = vld [vmem:[%s382 + $0x54] sm:$0xf]
      %v575 = vld [vmem:[%s382 + $0x58] sm:$0xf]
      %v576 = vld [vmem:[%s382 + $0x5c] sm:$0xf]
      %v577 = vld [vmem:[%s382 + $0x60] sm:$0xf]
      %v578 = vld [vmem:[%s382 + $0x64] sm:$0xf]
      %v579 = vld [vmem:[%s382 + $0x68] sm:$0xf]
      %v580 = vld [vmem:[%s382 + $0x6c] sm:$0xf]
      %v581 = vld [vmem:[%s382 + $0x70] sm:$0xf]
      %v582 = vld [vmem:[%s382 + $0x74] sm:$0xf]
      %v583 = vld [vmem:[%s382 + $0x78] sm:$0xf]
      %v584 = vld [vmem:[%s382 + $0x7c] sm:$0xf]
      %vm585 = vsmask.f32 4368
      %vm586 = vmor %vm441, %vm585
      %v588 = vshrl.u32 %v553, 16
      %v590 = vrot.slane %v588, 7
      %v591 = vshll.u32 %v553, 16
      %v593 = vor.u32 %v590, %v591
      %v594 = vrot.slane %v590, 4
      %v596 = vshrl.u32 %v554, 16
      %v598 = vrot.slane %v596, 7
      %v599 = vshll.u32 %v554, 16
      %v601 = vor.u32 %v598, %v599
      %v602 = vsel %vm586, %v594, %v601
      %v603 = vrot.slane %v598, 4
      %v605 = vshrl.u32 %v555, 16
      %v607 = vrot.slane %v605, 7
      %v608 = vshll.u32 %v555, 16
      %v610 = vor.u32 %v607, %v608
      %v611 = vrot.slane %v607, 4
      %v613 = vshrl.u32 %v556, 16
      %v615 = vrot.slane %v613, 7
      %v616 = vshll.u32 %v556, 16
      %v618 = vor.u32 %v615, %v616
      %v619 = vsel %vm586, %v611, %v618
      %v620 = vrot.slane %v615, 4
      %v622 = vshrl.u32 %v557, 16
      %v624 = vrot.slane %v622, 7
      %v625 = vshll.u32 %v557, 16
      %v627 = vor.u32 %v624, %v625
      %v628 = vrot.slane %v624, 4
      %v630 = vshrl.u32 %v558, 16
      %v632 = vrot.slane %v630, 7
      %v633 = vshll.u32 %v558, 16
      %v635 = vor.u32 %v632, %v633
      %v636 = vsel %vm586, %v628, %v635
      %v637 = vrot.slane %v632, 4
      %v639 = vshrl.u32 %v559, 16
      %v641 = vrot.slane %v639, 7
      %v642 = vshll.u32 %v559, 16
      %v644 = vor.u32 %v641, %v642
      %v645 = vrot.slane %v641, 4
      %v647 = vshrl.u32 %v560, 16
      %v649 = vrot.slane %v647, 7
      %v650 = vshll.u32 %v560, 16
      %v652 = vor.u32 %v649, %v650
      %v653 = vsel %vm586, %v645, %v652
      %v654 = vrot.slane %v649, 4
      %v656 = vshrl.u32 %v561, 16
      %v658 = vrot.slane %v656, 7
      %v659 = vshll.u32 %v561, 16
      %v661 = vor.u32 %v658, %v659
      %v662 = vrot.slane %v658, 4
      %v664 = vshrl.u32 %v562, 16
      %v666 = vrot.slane %v664, 7
      %v667 = vshll.u32 %v562, 16
      %v669 = vor.u32 %v666, %v667
      %v670 = vsel %vm586, %v662, %v669
      %v671 = vrot.slane %v666, 4
      %v673 = vshrl.u32 %v563, 16
      %v675 = vrot.slane %v673, 7
      %v676 = vshll.u32 %v563, 16
      %v678 = vor.u32 %v675, %v676
      %v679 = vrot.slane %v675, 4
      %v681 = vshrl.u32 %v564, 16
      %v683 = vrot.slane %v681, 7
      %v684 = vshll.u32 %v564, 16
      %v686 = vor.u32 %v683, %v684
      %v687 = vsel %vm586, %v679, %v686
      %v688 = vrot.slane %v683, 4
      %v690 = vshrl.u32 %v565, 16
      %v692 = vrot.slane %v690, 7
      %v693 = vshll.u32 %v565, 16
      %v695 = vor.u32 %v692, %v693
      %v696 = vrot.slane %v692, 4
      %v698 = vshrl.u32 %v566, 16
      %v700 = vrot.slane %v698, 7
      %v701 = vshll.u32 %v566, 16
      %v703 = vor.u32 %v700, %v701
      %v704 = vsel %vm586, %v696, %v703
      %v705 = vrot.slane %v700, 4
      %v707 = vshrl.u32 %v567, 16
      %v709 = vrot.slane %v707, 7
      %v710 = vshll.u32 %v567, 16
      %v712 = vor.u32 %v709, %v710
      %v713 = vrot.slane %v709, 4
      %v715 = vshrl.u32 %v568, 16
      %v717 = vrot.slane %v715, 7
      %v718 = vshll.u32 %v568, 16
      %v720 = vor.u32 %v717, %v718
      %v721 = vsel %vm586, %v713, %v720
      %v722 = vrot.slane %v717, 4
      %v724 = vshrl.u32 %v569, 16
      %v726 = vrot.slane %v724, 7
      %v727 = vshll.u32 %v569, 16
      %v729 = vor.u32 %v726, %v727
      %v730 = vrot.slane %v726, 4
      %v732 = vshrl.u32 %v570, 16
      %v734 = vrot.slane %v732, 7
      %v735 = vshll.u32 %v570, 16
      %v737 = vor.u32 %v734, %v735
      %v738 = vsel %vm586, %v730, %v737
      %v739 = vrot.slane %v734, 4
      %v741 = vshrl.u32 %v571, 16
      %v743 = vrot.slane %v741, 7
      %v744 = vshll.u32 %v571, 16
      %v746 = vor.u32 %v743, %v744
      %v747 = vrot.slane %v743, 4
      %v749 = vshrl.u32 %v572, 16
      %v751 = vrot.slane %v749, 7
      %v752 = vshll.u32 %v572, 16
      %v754 = vor.u32 %v751, %v752
      %v755 = vsel %vm586, %v747, %v754
      %v756 = vrot.slane %v751, 4
      %v758 = vshrl.u32 %v573, 16
      %v760 = vrot.slane %v758, 7
      %v761 = vshll.u32 %v573, 16
      %v763 = vor.u32 %v760, %v761
      %v764 = vrot.slane %v760, 4
      %v766 = vshrl.u32 %v574, 16
      %v768 = vrot.slane %v766, 7
      %v769 = vshll.u32 %v574, 16
      %v771 = vor.u32 %v768, %v769
      %v772 = vsel %vm586, %v764, %v771
      %v773 = vrot.slane %v768, 4
      %v775 = vshrl.u32 %v575, 16
      %v777 = vrot.slane %v775, 7
      %v778 = vshll.u32 %v575, 16
      %v780 = vor.u32 %v777, %v778
      %v781 = vrot.slane %v777, 4
      %v783 = vshrl.u32 %v576, 16
      %v785 = vrot.slane %v783, 7
      %v786 = vshll.u32 %v576, 16
      %v788 = vor.u32 %v785, %v786
      %v789 = vsel %vm586, %v781, %v788
      %v790 = vrot.slane %v785, 4
      %v792 = vshrl.u32 %v577, 16
      %v794 = vrot.slane %v792, 7
      %v795 = vshll.u32 %v577, 16
      %v797 = vor.u32 %v794, %v795
      %v798 = vrot.slane %v794, 4
      %v800 = vshrl.u32 %v578, 16
      %v802 = vrot.slane %v800, 7
      %v803 = vshll.u32 %v578, 16
      %v805 = vor.u32 %v802, %v803
      %v806 = vsel %vm586, %v798, %v805
      %v807 = vrot.slane %v802, 4
      %v809 = vshrl.u32 %v579, 16
      %v811 = vrot.slane %v809, 7
      %v812 = vshll.u32 %v579, 16
      %v814 = vor.u32 %v811, %v812
      %v815 = vrot.slane %v811, 4
      %v817 = vshrl.u32 %v580, 16
      %v819 = vrot.slane %v817, 7
      %v820 = vshll.u32 %v580, 16
      %v822 = vor.u32 %v819, %v820
      %v823 = vsel %vm586, %v815, %v822
      %v824 = vrot.slane %v819, 4
      %v826 = vshrl.u32 %v581, 16
      %v828 = vrot.slane %v826, 7
      %v829 = vshll.u32 %v581, 16
      %v831 = vor.u32 %v828, %v829
      %v832 = vrot.slane %v828, 4
      %v834 = vshrl.u32 %v582, 16
      %v836 = vrot.slane %v834, 7
      %v837 = vshll.u32 %v582, 16
      %v839 = vor.u32 %v836, %v837
      %v840 = vsel %vm586, %v832, %v839
      %v841 = vrot.slane %v836, 4
      %v843 = vshrl.u32 %v583, 16
      %v845 = vrot.slane %v843, 7
      %v846 = vshll.u32 %v583, 16
      %v848 = vor.u32 %v845, %v846
      %v849 = vrot.slane %v845, 4
      %v851 = vshrl.u32 %v584, 16
      %v853 = vrot.slane %v851, 7
      %v854 = vshll.u32 %v584, 16
      %v856 = vor.u32 %v853, %v854
      %v857 = vsel %vm586, %v849, %v856
      %v858 = vrot.slane %v853, 4
      %s907 = scalar_lea.vmem [#allocation2], 12
      %vm908 = vcmask 27648
      %vm909 = vmand %vm908, %vm497
      %v910 = vld [vmem:[%s907] sm:$0xf]
      %v911 = vsel %vm909, %v593, %v910
      %912 = vst [vmem:[%s907] sm:$0xf] %v911
      %vm913 = vcmask 27648
      %914 = vst.msk [vmem:[%s907 + $0x4] sm:$0xf] %vm913, %v602
      %v915 = vld [vmem:[%s907 + $0x8] sm:$0x1]
      %v916 = vsel %vm442, %v603, %v915
      %917 = vst [vmem:[%s907 + $0x8] sm:$0x1] %v916
      %v918 = vld [vmem:[%s907 + $0xc] sm:$0xf]
      %v919 = vsel %vm909, %v610, %v918
      %920 = vst [vmem:[%s907 + $0xc] sm:$0xf] %v919
      %921 = vst.msk [vmem:[%s907 + $0x10] sm:$0xf] %vm913, %v619
      %v922 = vld [vmem:[%s907 + $0x14] sm:$0x1]
      %v923 = vsel %vm442, %v620, %v922
      %924 = vst [vmem:[%s907 + $0x14] sm:$0x1] %v923
      %v925 = vld [vmem:[%s907 + $0x18] sm:$0xf]
      %v926 = vsel %vm909, %v627, %v925
      %927 = vst [vmem:[%s907 + $0x18] sm:$0xf] %v926
      %928 = vst.msk [vmem:[%s907 + $0x1c] sm:$0xf] %vm913, %v636
      %v929 = vld [vmem:[%s907 + $0x20] sm:$0x1]
      %v930 = vsel %vm442, %v637, %v929
      %931 = vst [vmem:[%s907 + $0x20] sm:$0x1] %v930
      %v932 = vld [vmem:[%s907 + $0x24] sm:$0xf]
      %v933 = vsel %vm909, %v644, %v932
      %934 = vst [vmem:[%s907 + $0x24] sm:$0xf] %v933
      %935 = vst.msk [vmem:[%s907 + $0x28] sm:$0xf] %vm913, %v653
      %v936 = vld [vmem:[%s907 + $0x2c] sm:$0x1]
      %v937 = vsel %vm442, %v654, %v936
      %938 = vst [vmem:[%s907 + $0x2c] sm:$0x1] %v937
      %v939 = vld [vmem:[%s907 + $0x30] sm:$0xf]
      %v940 = vsel %vm909, %v661, %v939
      %941 = vst [vmem:[%s907 + $0x30] sm:$0xf] %v940
      %942 = vst.msk [vmem:[%s907 + $0x34] sm:$0xf] %vm913, %v670
      %v943 = vld [vmem:[%s907 + $0x38] sm:$0x1]
      %v944 = vsel %vm442, %v671, %v943
      %945 = vst [vmem:[%s907 + $0x38] sm:$0x1] %v944
      %v946 = vld [vmem:[%s907 + $0x3c] sm:$0xf]
      %v947 = vsel %vm909, %v678, %v946
      %948 = vst [vmem:[%s907 + $0x3c] sm:$0xf] %v947
      %949 = vst.msk [vmem:[%s907 + $0x40] sm:$0xf] %vm913, %v687
      %v950 = vld [vmem:[%s907 + $0x44] sm:$0x1]
      %v951 = vsel %vm442, %v688, %v950
      %952 = vst [vmem:[%s907 + $0x44] sm:$0x1] %v951
      %v953 = vld [vmem:[%s907 + $0x48] sm:$0xf]
      %v954 = vsel %vm909, %v695, %v953
      %955 = vst [vmem:[%s907 + $0x48] sm:$0xf] %v954
      %956 = vst.msk [vmem:[%s907 + $0x4c] sm:$0xf] %vm913, %v704
      %v957 = vld [vmem:[%s907 + $0x50] sm:$0x1]
      %v958 = vsel %vm442, %v705, %v957
      %959 = vst [vmem:[%s907 + $0x50] sm:$0x1] %v958
      %v960 = vld [vmem:[%s907 + $0x54] sm:$0xf]
      %v961 = vsel %vm909, %v712, %v960
      %962 = vst [vmem:[%s907 + $0x54] sm:$0xf] %v961
      %963 = vst.msk [vmem:[%s907 + $0x58] sm:$0xf] %vm913, %v721
      %v964 = vld [vmem:[%s907 + $0x5c] sm:$0x1]
      %v965 = vsel %vm442, %v722, %v964
      %966 = vst [vmem:[%s907 + $0x5c] sm:$0x1] %v965
      %v967 = vld [vmem:[%s907 + $0x60] sm:$0xf]
      %v968 = vsel %vm909, %v729, %v967
      %969 = vst [vmem:[%s907 + $0x60] sm:$0xf] %v968
      %970 = vst.msk [vmem:[%s907 + $0x64] sm:$0xf] %vm913, %v738
      %v971 = vld [vmem:[%s907 + $0x68] sm:$0x1]
      %v972 = vsel %vm442, %v739, %v971
      %973 = vst [vmem:[%s907 + $0x68] sm:$0x1] %v972
      %v974 = vld [vmem:[%s907 + $0x6c] sm:$0xf]
      %v975 = vsel %vm909, %v746, %v974
      %976 = vst [vmem:[%s907 + $0x6c] sm:$0xf] %v975
      %977 = vst.msk [vmem:[%s907 + $0x70] sm:$0xf] %vm913, %v755
      %v978 = vld [vmem:[%s907 + $0x74] sm:$0x1]
      %v979 = vsel %vm442, %v756, %v978
      %980 = vst [vmem:[%s907 + $0x74] sm:$0x1] %v979
      %v981 = vld [vmem:[%s907 + $0x78] sm:$0xf]
      %v982 = vsel %vm909, %v763, %v981
      %983 = vst [vmem:[%s907 + $0x78] sm:$0xf] %v982
      %984 = vst.msk [vmem:[%s907 + $0x7c] sm:$0xf] %vm913, %v772
      %v985 = vld [vmem:[%s907 + $0x80] sm:$0x1]
      %v986 = vsel %vm442, %v773, %v985
      %987 = vst [vmem:[%s907 + $0x80] sm:$0x1] %v986
      %v988 = vld [vmem:[%s907 + $0x84] sm:$0xf]
      %v989 = vsel %vm909, %v780, %v988
      %990 = vst [vmem:[%s907 + $0x84] sm:$0xf] %v989
      %991 = vst.msk [vmem:[%s907 + $0x88] sm:$0xf] %vm913, %v789
      %v992 = vld [vmem:[%s907 + $0x8c] sm:$0x1]
      %v993 = vsel %vm442, %v790, %v992
      %994 = vst [vmem:[%s907 + $0x8c] sm:$0x1] %v993
      %v995 = vld [vmem:[%s907 + $0x90] sm:$0xf]
      %v996 = vsel %vm909, %v797, %v995
      %997 = vst [vmem:[%s907 + $0x90] sm:$0xf] %v996
      %998 = vst.msk [vmem:[%s907 + $0x94] sm:$0xf] %vm913, %v806
      %v999 = vld [vmem:[%s907 + $0x98] sm:$0x1]
      %v1000 = vsel %vm442, %v807, %v999
      %1001 = vst [vmem:[%s907 + $0x98] sm:$0x1] %v1000
      %v1002 = vld [vmem:[%s907 + $0x9c] sm:$0xf]
      %v1003 = vsel %vm909, %v814, %v1002
      %1004 = vst [vmem:[%s907 + $0x9c] sm:$0xf] %v1003
      %1005 = vst.msk [vmem:[%s907 + $0xa0] sm:$0xf] %vm913, %v823
      %v1006 = vld [vmem:[%s907 + $0xa4] sm:$0x1]
      %v1007 = vsel %vm442, %v824, %v1006
      %1008 = vst [vmem:[%s907 + $0xa4] sm:$0x1] %v1007
      %v1009 = vld [vmem:[%s907 + $0xa8] sm:$0xf]
      %v1010 = vsel %vm909, %v831, %v1009
      %1011 = vst [vmem:[%s907 + $0xa8] sm:$0xf] %v1010
      %1012 = vst.msk [vmem:[%s907 + $0xac] sm:$0xf] %vm913, %v840
      %v1013 = vld [vmem:[%s907 + $0xb0] sm:$0x1]
      %v1014 = vsel %vm442, %v841, %v1013
      %1015 = vst [vmem:[%s907 + $0xb0] sm:$0x1] %v1014
      %v1016 = vld [vmem:[%s907 + $0xb4] sm:$0xf]
      %v1017 = vsel %vm909, %v848, %v1016
      %1018 = vst [vmem:[%s907 + $0xb4] sm:$0xf] %v1017
      %1019 = vst.msk [vmem:[%s907 + $0xb8] sm:$0xf] %vm913, %v857
      %v1020 = vld [vmem:[%s907 + $0xbc] sm:$0x1]
      %v1021 = vsel %vm442, %v858, %v1020
      %1022 = vst [vmem:[%s907 + $0xbc] sm:$0x1] %v1021
      %v1023 = vld [vmem:[%s396] sm:$0xf]
      %v1024 = vld [vmem:[%s396 + $0x4] sm:$0xf]
      %v1025 = vld [vmem:[%s413] sm:$0xf]
      %v1026 = vld [vmem:[%s413 + $0x4] sm:$0xf]
      %p1027 = scmp.gt.s32.totalorder %s23, 0
      %s1028 = scalar_select %p1027, 1, 0
      %v1029 = vstv %s1028
      %vm1030 = vcmp.eq.s32.totalorder %v1029, 1
      %v1031 = vsel %vm1030, %v1023, 0
      %v1032 = vsel %vm1030, %v1024, 0
      %v1034 = vshrl.u32 %v1031, 16
      %v1036 = vrot.slane %v1034, 7
      %v1037 = vshll.u32 %v1031, 16
      %v1039 = vor.u32 %v1036, %v1037
      %v1040 = vrot.slane %v1036, 4
      %v1042 = vshrl.u32 %v1032, 16
      %v1044 = vrot.slane %v1042, 7
      %v1045 = vshll.u32 %v1032, 16
      %v1047 = vor.u32 %v1044, %v1045
      %v1048 = vsel %vm586, %v1040, %v1047
      %v1049 = vrot.slane %v1044, 4
      %v1053 = vld [vmem:[#allocation2] sm:$0xf]
      %v1054 = vsel %vm909, %v1039, %v1053
      %1055 = vst [vmem:[#allocation2] sm:$0xf] %v1054
      %1056 = vst.msk [vmem:[#allocation2 + $0x4] sm:$0xf] %vm913, %v1048
      %v1057 = vld [vmem:[#allocation2 + $0x8] sm:$0x1]
      %v1058 = vsel %vm442, %v1049, %v1057
      %1059 = vst [vmem:[#allocation2 + $0x8] sm:$0x1] %v1058
      %p1060 = scmp.lt.s32.totalorder %s23, 0
      %s1061 = scalar_select %p1060, 1, 0
      %v1062 = vstv %s1061
      %vm1063 = vcmp.eq.s32.totalorder %v1062, 1
      %v1064 = vsel %vm1063, %v1025, 0
      %v1065 = vsel %vm1063, %v1026, 0
      %v1067 = vshrl.u32 %v1064, 16
      %v1069 = vrot.slane %v1067, 7
      %v1070 = vshll.u32 %v1064, 16
      %v1072 = vor.u32 %v1069, %v1070
      %v1073 = vrot.slane %v1069, 4
      %v1075 = vshrl.u32 %v1065, 16
      %v1077 = vrot.slane %v1075, 7
      %v1078 = vshll.u32 %v1065, 16
      %v1080 = vor.u32 %v1077, %v1078
      %v1081 = vsel %vm586, %v1073, %v1080
      %v1082 = vrot.slane %v1077, 4
      %s1086 = scalar_lea.vmem [#allocation2], 204
      %v1087 = vld [vmem:[%s1086] sm:$0xf]
      %v1088 = vsel %vm909, %v1072, %v1087
      %1089 = vst [vmem:[%s1086] sm:$0xf] %v1088
      %1090 = vst.msk [vmem:[%s1086 + $0x4] sm:$0xf] %vm913, %v1081
      %v1091 = vld [vmem:[%s1086 + $0x8] sm:$0x1]
      %v1092 = vsel %vm442, %v1082, %v1091
      %1093 = vst [vmem:[%s1086 + $0x8] sm:$0x1] %v1092
      %v1094 = vld [vmem:[#allocation2] sm:$0xf]
      %v1095 = vld [vmem:[#allocation2 + $0x4] sm:$0xf]
      %v1096 = vld [vmem:[#allocation2 + $0xc] sm:$0xf]
      %v1097 = vld [vmem:[#allocation2 + $0x10] sm:$0xf]
      %v1098 = vld [vmem:[#allocation2 + $0x18] sm:$0xf]
      %v1099 = vld [vmem:[#allocation2 + $0x1c] sm:$0xf]
      %v1100 = vld [vmem:[#allocation2 + $0x24] sm:$0xf]
      %v1101 = vld [vmem:[#allocation2 + $0x28] sm:$0xf]
      %v1102 = vld [vmem:[#allocation2 + $0x30] sm:$0xf]
      %v1103 = vld [vmem:[#allocation2 + $0x34] sm:$0xf]
      %v1104 = vld [vmem:[#allocation2 + $0x3c] sm:$0xf]
      %v1105 = vld [vmem:[#allocation2 + $0x40] sm:$0xf]
      %v1106 = vld [vmem:[#allocation2 + $0x48] sm:$0xf]
      %v1107 = vld [vmem:[#allocation2 + $0x4c] sm:$0xf]
      %v1108 = vld [vmem:[#allocation2 + $0x54] sm:$0xf]
      %v1109 = vld [vmem:[#allocation2 + $0x58] sm:$0xf]
      %v1110 = vld [vmem:[#allocation2 + $0x60] sm:$0xf]
      %v1111 = vld [vmem:[#allocation2 + $0x64] sm:$0xf]
      %v1112 = vld [vmem:[#allocation2 + $0x6c] sm:$0xf]
      %v1113 = vld [vmem:[#allocation2 + $0x70] sm:$0xf]
      %v1114 = vld [vmem:[#allocation2 + $0x78] sm:$0xf]
      %v1115 = vld [vmem:[#allocation2 + $0x7c] sm:$0xf]
      %v1116 = vld [vmem:[#allocation2 + $0x84] sm:$0xf]
      %v1117 = vld [vmem:[#allocation2 + $0x88] sm:$0xf]
      %v1118 = vld [vmem:[#allocation2 + $0x90] sm:$0xf]
      %v1119 = vld [vmem:[#allocation2 + $0x94] sm:$0xf]
      %v1120 = vld [vmem:[#allocation2 + $0x9c] sm:$0xf]
      %v1121 = vld [vmem:[#allocation2 + $0xa0] sm:$0xf]
      %v1122 = vld [vmem:[#allocation2 + $0xa8] sm:$0xf]
      %v1123 = vld [vmem:[#allocation2 + $0xac] sm:$0xf]
      %v1124 = vld [vmem:[#allocation2 + $0xb4] sm:$0xf]
      %v1125 = vld [vmem:[#allocation2 + $0xb8] sm:$0xf]
      %v1126 = vld [vmem:[#allocation2 + $0x8] sm:$0x1]
      %v1127 = vld [vmem:[#allocation2 + $0x14] sm:$0x1]
      %v1128 = vld [vmem:[#allocation2 + $0x20] sm:$0x1]
      %v1129 = vld [vmem:[#allocation2 + $0x2c] sm:$0x1]
      %v1130 = vld [vmem:[#allocation2 + $0x38] sm:$0x1]
      %v1131 = vld [vmem:[#allocation2 + $0x44] sm:$0x1]
      %v1132 = vld [vmem:[#allocation2 + $0x50] sm:$0x1]
      %v1133 = vld [vmem:[#allocation2 + $0x5c] sm:$0x1]
      %v1134 = vld [vmem:[#allocation2 + $0x68] sm:$0x1]
      %v1135 = vld [vmem:[#allocation2 + $0x74] sm:$0x1]
      %v1136 = vld [vmem:[#allocation2 + $0x80] sm:$0x1]
      %v1137 = vld [vmem:[#allocation2 + $0x8c] sm:$0x1]
      %v1138 = vld [vmem:[#allocation2 + $0x98] sm:$0x1]
      %v1139 = vld [vmem:[#allocation2 + $0xa4] sm:$0x1]
      %v1140 = vld [vmem:[#allocation2 + $0xb0] sm:$0x1]
      %v1141 = vld [vmem:[#allocation2 + $0xbc] sm:$0x1]
      %v1142 = vld [vmem:[#allocation2] sm:$0xe]
      %v1143 = vld [vmem:[#allocation2 + $0xc] sm:$0xe]
      %v1144 = vld [vmem:[#allocation2 + $0x18] sm:$0xe]
      %v1145 = vld [vmem:[#allocation2 + $0x24] sm:$0xe]
      %v1146 = vld [vmem:[#allocation2 + $0x30] sm:$0xe]
      %v1147 = vld [vmem:[#allocation2 + $0x3c] sm:$0xe]
      %v1148 = vld [vmem:[#allocation2 + $0x48] sm:$0xe]
      %v1149 = vld [vmem:[#allocation2 + $0x54] sm:$0xe]
      %v1150 = vld [vmem:[#allocation2 + $0x60] sm:$0xe]
      %v1151 = vld [vmem:[#allocation2 + $0x6c] sm:$0xe]
      %v1152 = vld [vmem:[#allocation2 + $0x78] sm:$0xe]
      %v1153 = vld [vmem:[#allocation2 + $0x84] sm:$0xe]
      %v1154 = vld [vmem:[#allocation2 + $0x90] sm:$0xe]
      %v1155 = vld [vmem:[#allocation2 + $0x9c] sm:$0xe]
      %v1156 = vld [vmem:[#allocation2 + $0xa8] sm:$0xe]
      %v1157 = vld [vmem:[#allocation2 + $0xb4] sm:$0xe]
      %v1158 = vld [vmem:[%s907] sm:$0xf]
      %v1159 = vld [vmem:[%s907 + $0x4] sm:$0xf]
      %v1160 = vld [vmem:[%s907 + $0xc] sm:$0xf]
      %v1161 = vld [vmem:[%s907 + $0x10] sm:$0xf]
      %v1162 = vld [vmem:[%s907 + $0x18] sm:$0xf]
      %v1163 = vld [vmem:[%s907 + $0x1c] sm:$0xf]
      %v1164 = vld [vmem:[%s907 + $0x24] sm:$0xf]
      %v1165 = vld [vmem:[%s907 + $0x28] sm:$0xf]
      %v1166 = vld [vmem:[%s907 + $0x30] sm:$0xf]
      %v1167 = vld [vmem:[%s907 + $0x34] sm:$0xf]
      %v1168 = vld [vmem:[%s907 + $0x3c] sm:$0xf]
      %v1169 = vld [vmem:[%s907 + $0x40] sm:$0xf]
      %v1170 = vld [vmem:[%s907 + $0x48] sm:$0xf]
      %v1171 = vld [vmem:[%s907 + $0x4c] sm:$0xf]
      %v1172 = vld [vmem:[%s907 + $0x54] sm:$0xf]
      %v1173 = vld [vmem:[%s907 + $0x58] sm:$0xf]
      %v1174 = vld [vmem:[%s907 + $0x60] sm:$0xf]
      %v1175 = vld [vmem:[%s907 + $0x64] sm:$0xf]
      %v1176 = vld [vmem:[%s907 + $0x6c] sm:$0xf]
      %v1177 = vld [vmem:[%s907 + $0x70] sm:$0xf]
      %v1178 = vld [vmem:[%s907 + $0x78] sm:$0xf]
      %v1179 = vld [vmem:[%s907 + $0x7c] sm:$0xf]
      %v1180 = vld [vmem:[%s907 + $0x84] sm:$0xf]
      %v1181 = vld [vmem:[%s907 + $0x88] sm:$0xf]
      %v1182 = vld [vmem:[%s907 + $0x90] sm:$0xf]
      %v1183 = vld [vmem:[%s907 + $0x94] sm:$0xf]
      %v1184 = vld [vmem:[%s907 + $0x9c] sm:$0xf]
      %v1185 = vld [vmem:[%s907 + $0xa0] sm:$0xf]
      %v1186 = vld [vmem:[%s907 + $0xa8] sm:$0xf]
      %v1187 = vld [vmem:[%s907 + $0xac] sm:$0xf]
      %v1188 = vld [vmem:[%s907 + $0xb4] sm:$0xf]
      %v1189 = vld [vmem:[%s907 + $0xb8] sm:$0xf]
      %v1190 = vld [vmem:[%s907 + $0x8] sm:$0x1]
      %v1191 = vld [vmem:[%s907 + $0x14] sm:$0x1]
      %v1192 = vld [vmem:[%s907 + $0x20] sm:$0x1]
      %v1193 = vld [vmem:[%s907 + $0x2c] sm:$0x1]
      %v1194 = vld [vmem:[%s907 + $0x38] sm:$0x1]
      %v1195 = vld [vmem:[%s907 + $0x44] sm:$0x1]
      %v1196 = vld [vmem:[%s907 + $0x50] sm:$0x1]
      %v1197 = vld [vmem:[%s907 + $0x5c] sm:$0x1]
      %v1198 = vld [vmem:[%s907 + $0x68] sm:$0x1]
      %v1199 = vld [vmem:[%s907 + $0x74] sm:$0x1]
      %v1200 = vld [vmem:[%s907 + $0x80] sm:$0x1]
      %v1201 = vld [vmem:[%s907 + $0x8c] sm:$0x1]
      %v1202 = vld [vmem:[%s907 + $0x98] sm:$0x1]
      %v1203 = vld [vmem:[%s907 + $0xa4] sm:$0x1]
      %v1204 = vld [vmem:[%s907 + $0xb0] sm:$0x1]
      %v1205 = vld [vmem:[%s907 + $0xbc] sm:$0x1]
      %v1206 = vld [vmem:[%s907] sm:$0xe]
      %v1207 = vld [vmem:[%s907 + $0xc] sm:$0xe]
      %v1208 = vld [vmem:[%s907 + $0x18] sm:$0xe]
      %v1209 = vld [vmem:[%s907 + $0x24] sm:$0xe]
      %v1210 = vld [vmem:[%s907 + $0x30] sm:$0xe]
      %v1211 = vld [vmem:[%s907 + $0x3c] sm:$0xe]
      %v1212 = vld [vmem:[%s907 + $0x48] sm:$0xe]
      %v1213 = vld [vmem:[%s907 + $0x54] sm:$0xe]
      %v1214 = vld [vmem:[%s907 + $0x60] sm:$0xe]
      %v1215 = vld [vmem:[%s907 + $0x6c] sm:$0xe]
      %v1216 = vld [vmem:[%s907 + $0x78] sm:$0xe]
      %v1217 = vld [vmem:[%s907 + $0x84] sm:$0xe]
      %v1218 = vld [vmem:[%s907 + $0x90] sm:$0xe]
      %v1219 = vld [vmem:[%s907 + $0x9c] sm:$0xe]
      %v1220 = vld [vmem:[%s907 + $0xa8] sm:$0xe]
      %v1221 = vld [vmem:[%s907 + $0xb4] sm:$0xe]
      %s1222 = scalar_lea.vmem [#allocation2], 24
      %v1223 = vld [vmem:[%s1222] sm:$0xf]
      %v1224 = vld [vmem:[%s1222 + $0x4] sm:$0xf]
      %v1225 = vld [vmem:[%s1222 + $0xc] sm:$0xf]
      %v1226 = vld [vmem:[%s1222 + $0x10] sm:$0xf]
      %v1227 = vld [vmem:[%s1222 + $0x18] sm:$0xf]
      %v1228 = vld [vmem:[%s1222 + $0x1c] sm:$0xf]
      %v1229 = vld [vmem:[%s1222 + $0x24] sm:$0xf]
      %v1230 = vld [vmem:[%s1222 + $0x28] sm:$0xf]
      %v1231 = vld [vmem:[%s1222 + $0x30] sm:$0xf]
      %v1232 = vld [vmem:[%s1222 + $0x34] sm:$0xf]
      %v1233 = vld [vmem:[%s1222 + $0x3c] sm:$0xf]
      %v1234 = vld [vmem:[%s1222 + $0x40] sm:$0xf]
      %v1235 = vld [vmem:[%s1222 + $0x48] sm:$0xf]
      %v1236 = vld [vmem:[%s1222 + $0x4c] sm:$0xf]
      %v1237 = vld [vmem:[%s1222 + $0x54] sm:$0xf]
      %v1238 = vld [vmem:[%s1222 + $0x58] sm:$0xf]
      %v1239 = vld [vmem:[%s1222 + $0x60] sm:$0xf]
      %v1240 = vld [vmem:[%s1222 + $0x64] sm:$0xf]
      %v1241 = vld [vmem:[%s1222 + $0x6c] sm:$0xf]
      %v1242 = vld [vmem:[%s1222 + $0x70] sm:$0xf]
      %v1243 = vld [vmem:[%s1222 + $0x78] sm:$0xf]
      %v1244 = vld [vmem:[%s1222 + $0x7c] sm:$0xf]
      %v1245 = vld [vmem:[%s1222 + $0x84] sm:$0xf]
      %v1246 = vld [vmem:[%s1222 + $0x88] sm:$0xf]
      %v1247 = vld [vmem:[%s1222 + $0x90] sm:$0xf]
      %v1248 = vld [vmem:[%s1222 + $0x94] sm:$0xf]
      %v1249 = vld [vmem:[%s1222 + $0x9c] sm:$0xf]
      %v1250 = vld [vmem:[%s1222 + $0xa0] sm:$0xf]
      %v1251 = vld [vmem:[%s1222 + $0xa8] sm:$0xf]
      %v1252 = vld [vmem:[%s1222 + $0xac] sm:$0xf]
      %v1253 = vld [vmem:[%s1222 + $0xb4] sm:$0xf]
      %v1254 = vld [vmem:[%s1222 + $0xb8] sm:$0xf]
      %v1255 = vld [vmem:[%s1222 + $0x8] sm:$0x1]
      %v1256 = vld [vmem:[%s1222 + $0x14] sm:$0x1]
      %v1257 = vld [vmem:[%s1222 + $0x20] sm:$0x1]
      %v1258 = vld [vmem:[%s1222 + $0x2c] sm:$0x1]
      %v1259 = vld [vmem:[%s1222 + $0x38] sm:$0x1]
      %v1260 = vld [vmem:[%s1222 + $0x44] sm:$0x1]
      %v1261 = vld [vmem:[%s1222 + $0x50] sm:$0x1]
      %v1262 = vld [vmem:[%s1222 + $0x5c] sm:$0x1]
      %v1263 = vld [vmem:[%s1222 + $0x68] sm:$0x1]
      %v1264 = vld [vmem:[%s1222 + $0x74] sm:$0x1]
      %v1265 = vld [vmem:[%s1222 + $0x80] sm:$0x1]
      %v1266 = vld [vmem:[%s1222 + $0x8c] sm:$0x1]
      %v1267 = vld [vmem:[%s1222 + $0x98] sm:$0x1]
      %v1268 = vld [vmem:[%s1222 + $0xa4] sm:$0x1]
      %v1269 = vld [vmem:[%s1222 + $0xb0] sm:$0x1]
      %v1270 = vld [vmem:[%s1222 + $0xbc] sm:$0x1]
      %v1271 = vld [vmem:[%s1222] sm:$0xe]
      %v1272 = vld [vmem:[%s1222 + $0xc] sm:$0xe]
      %v1273 = vld [vmem:[%s1222 + $0x18] sm:$0xe]
      %v1274 = vld [vmem:[%s1222 + $0x24] sm:$0xe]
      %v1275 = vld [vmem:[%s1222 + $0x30] sm:$0xe]
      %v1276 = vld [vmem:[%s1222 + $0x3c] sm:$0xe]
      %v1277 = vld [vmem:[%s1222 + $0x48] sm:$0xe]
      %v1278 = vld [vmem:[%s1222 + $0x54] sm:$0xe]
      %v1279 = vld [vmem:[%s1222 + $0x60] sm:$0xe]
      %v1280 = vld [vmem:[%s1222 + $0x6c] sm:$0xe]
      %v1281 = vld [vmem:[%s1222 + $0x78] sm:$0xe]
      %v1282 = vld [vmem:[%s1222 + $0x84] sm:$0xe]
      %v1283 = vld [vmem:[%s1222 + $0x90] sm:$0xe]
      %v1284 = vld [vmem:[%s1222 + $0x9c] sm:$0xe]
      %v1285 = vld [vmem:[%s1222 + $0xa8] sm:$0xe]
      %v1286 = vld [vmem:[%s1222 + $0xb4] sm:$0xe]
      %v1319 = vunpack.c.l.b16 %v1094
      %v1320 = vunpack.c.l.b16 %v1095
      %v1321 = vunpack.c.l.b16 %v1096
      %v1322 = vunpack.c.l.b16 %v1097
      %v1323 = vunpack.c.l.b16 %v1098
      %v1324 = vunpack.c.l.b16 %v1099
      %v1325 = vunpack.c.l.b16 %v1100
      %v1326 = vunpack.c.l.b16 %v1101
      %v1327 = vunpack.c.l.b16 %v1102
      %v1328 = vunpack.c.l.b16 %v1103
      %v1329 = vunpack.c.l.b16 %v1104
      %v1330 = vunpack.c.l.b16 %v1105
      %v1331 = vunpack.c.l.b16 %v1106
      %v1332 = vunpack.c.l.b16 %v1107
      %v1333 = vunpack.c.l.b16 %v1108
      %v1334 = vunpack.c.l.b16 %v1109
      %v1335 = vunpack.c.l.b16 %v1110
      %v1336 = vunpack.c.l.b16 %v1111
      %v1337 = vunpack.c.l.b16 %v1112
      %v1338 = vunpack.c.l.b16 %v1113
      %v1339 = vunpack.c.l.b16 %v1114
      %v1340 = vunpack.c.l.b16 %v1115
      %v1341 = vunpack.c.l.b16 %v1116
      %v1342 = vunpack.c.l.b16 %v1117
      %v1343 = vunpack.c.l.b16 %v1118
      %v1344 = vunpack.c.l.b16 %v1119
      %v1345 = vunpack.c.l.b16 %v1120
      %v1346 = vunpack.c.l.b16 %v1121
      %v1347 = vunpack.c.l.b16 %v1122
      %v1348 = vunpack.c.l.b16 %v1123
      %v1349 = vunpack.c.l.b16 %v1124
      %v1350 = vunpack.c.l.b16 %v1125
      %v1351 = vpack.c.b16 %v1320, %v1319
      %v1352 = vpack.c.b16 %v1322, %v1321
      %v1353 = vpack.c.b16 %v1324, %v1323
      %v1354 = vpack.c.b16 %v1326, %v1325
      %v1355 = vpack.c.b16 %v1328, %v1327
      %v1356 = vpack.c.b16 %v1330, %v1329
      %v1357 = vpack.c.b16 %v1332, %v1331
      %v1358 = vpack.c.b16 %v1334, %v1333
      %v1359 = vpack.c.b16 %v1336, %v1335
      %v1360 = vpack.c.b16 %v1338, %v1337
      %v1361 = vpack.c.b16 %v1340, %v1339
      %v1362 = vpack.c.b16 %v1342, %v1341
      %v1363 = vpack.c.b16 %v1344, %v1343
      %v1364 = vpack.c.b16 %v1346, %v1345
      %v1365 = vpack.c.b16 %v1348, %v1347
      %v1366 = vpack.c.b16 %v1350, %v1349
      %v1383 = vunpack.c.l.b16 %v1126
      %v1384 = vunpack.c.l.b16 %v1127
      %v1385 = vunpack.c.l.b16 %v1128
      %v1386 = vunpack.c.l.b16 %v1129
      %v1387 = vunpack.c.l.b16 %v1130
      %v1388 = vunpack.c.l.b16 %v1131
      %v1389 = vunpack.c.l.b16 %v1132
      %v1390 = vunpack.c.l.b16 %v1133
      %v1391 = vunpack.c.l.b16 %v1134
      %v1392 = vunpack.c.l.b16 %v1135
      %v1393 = vunpack.c.l.b16 %v1136
      %v1394 = vunpack.c.l.b16 %v1137
      %v1395 = vunpack.c.l.b16 %v1138
      %v1396 = vunpack.c.l.b16 %v1139
      %v1397 = vunpack.c.l.b16 %v1140
      %v1398 = vunpack.c.l.b16 %v1141
      %v1399 = vpack.c.b16 %v1383, %v1383
      %v1400 = vpack.c.b16 %v1384, %v1384
      %v1401 = vpack.c.b16 %v1385, %v1385
      %v1402 = vpack.c.b16 %v1386, %v1386
      %v1403 = vpack.c.b16 %v1387, %v1387
      %v1404 = vpack.c.b16 %v1388, %v1388
      %v1405 = vpack.c.b16 %v1389, %v1389
      %v1406 = vpack.c.b16 %v1390, %v1390
      %v1407 = vpack.c.b16 %v1391, %v1391
      %v1408 = vpack.c.b16 %v1392, %v1392
      %v1409 = vpack.c.b16 %v1393, %v1393
      %v1410 = vpack.c.b16 %v1394, %v1394
      %v1411 = vpack.c.b16 %v1395, %v1395
      %v1412 = vpack.c.b16 %v1396, %v1396
      %v1413 = vpack.c.b16 %v1397, %v1397
      %v1414 = vpack.c.b16 %v1398, %v1398
      %vm1415 = vsmask.f32 7424
      %v1417 = vshrl.u32 %v1351, 16
      %v1419 = vshll.u32 %v1351, 16
      %v1421 = vrot.slane %v1419, 1
      %v1422 = vor.u32 %v1417, %v1421
      %v1424 = vshll.u32 %v1399, 16
      %v1426 = vrot.slane %v1424, 1
      %v1427 = vsel %vm1415, %v1422, %v1426
      %v1429 = vshrl.u32 %v1352, 16
      %v1431 = vshll.u32 %v1352, 16
      %v1433 = vrot.slane %v1431, 1
      %v1434 = vor.u32 %v1429, %v1433
      %v1436 = vshll.u32 %v1400, 16
      %v1438 = vrot.slane %v1436, 1
      %v1439 = vsel %vm1415, %v1434, %v1438
      %v1441 = vshrl.u32 %v1353, 16
      %v1443 = vshll.u32 %v1353, 16
      %v1445 = vrot.slane %v1443, 1
      %v1446 = vor.u32 %v1441, %v1445
      %v1448 = vshll.u32 %v1401, 16
      %v1450 = vrot.slane %v1448, 1
      %v1451 = vsel %vm1415, %v1446, %v1450
      %v1453 = vshrl.u32 %v1354, 16
      %v1455 = vshll.u32 %v1354, 16
      %v1457 = vrot.slane %v1455, 1
      %v1458 = vor.u32 %v1453, %v1457
      %v1460 = vshll.u32 %v1402, 16
      %v1462 = vrot.slane %v1460, 1
      %v1463 = vsel %vm1415, %v1458, %v1462
      %v1465 = vshrl.u32 %v1355, 16
      %v1467 = vshll.u32 %v1355, 16
      %v1469 = vrot.slane %v1467, 1
      %v1470 = vor.u32 %v1465, %v1469
      %v1472 = vshll.u32 %v1403, 16
      %v1474 = vrot.slane %v1472, 1
      %v1475 = vsel %vm1415, %v1470, %v1474
      %v1477 = vshrl.u32 %v1356, 16
      %v1479 = vshll.u32 %v1356, 16
      %v1481 = vrot.slane %v1479, 1
      %v1482 = vor.u32 %v1477, %v1481
      %v1484 = vshll.u32 %v1404, 16
      %v1486 = vrot.slane %v1484, 1
      %v1487 = vsel %vm1415, %v1482, %v1486
      %v1489 = vshrl.u32 %v1357, 16
      %v1491 = vshll.u32 %v1357, 16
      %v1493 = vrot.slane %v1491, 1
      %v1494 = vor.u32 %v1489, %v1493
      %v1496 = vshll.u32 %v1405, 16
      %v1498 = vrot.slane %v1496, 1
      %v1499 = vsel %vm1415, %v1494, %v1498
      %v1501 = vshrl.u32 %v1358, 16
      %v1503 = vshll.u32 %v1358, 16
      %v1505 = vrot.slane %v1503, 1
      %v1506 = vor.u32 %v1501, %v1505
      %v1508 = vshll.u32 %v1406, 16
      %v1510 = vrot.slane %v1508, 1
      %v1511 = vsel %vm1415, %v1506, %v1510
      %v1513 = vshrl.u32 %v1359, 16
      %v1515 = vshll.u32 %v1359, 16
      %v1517 = vrot.slane %v1515, 1
      %v1518 = vor.u32 %v1513, %v1517
      %v1520 = vshll.u32 %v1407, 16
      %v1522 = vrot.slane %v1520, 1
      %v1523 = vsel %vm1415, %v1518, %v1522
      %v1525 = vshrl.u32 %v1360, 16
      %v1527 = vshll.u32 %v1360, 16
      %v1529 = vrot.slane %v1527, 1
      %v1530 = vor.u32 %v1525, %v1529
      %v1532 = vshll.u32 %v1408, 16
      %v1534 = vrot.slane %v1532, 1
      %v1535 = vsel %vm1415, %v1530, %v1534
      %v1537 = vshrl.u32 %v1361, 16
      %v1539 = vshll.u32 %v1361, 16
      %v1541 = vrot.slane %v1539, 1
      %v1542 = vor.u32 %v1537, %v1541
      %v1544 = vshll.u32 %v1409, 16
      %v1546 = vrot.slane %v1544, 1
      %v1547 = vsel %vm1415, %v1542, %v1546
      %v1549 = vshrl.u32 %v1362, 16
      %v1551 = vshll.u32 %v1362, 16
      %v1553 = vrot.slane %v1551, 1
      %v1554 = vor.u32 %v1549, %v1553
      %v1556 = vshll.u32 %v1410, 16
      %v1558 = vrot.slane %v1556, 1
      %v1559 = vsel %vm1415, %v1554, %v1558
      %v1561 = vshrl.u32 %v1363, 16
      %v1563 = vshll.u32 %v1363, 16
      %v1565 = vrot.slane %v1563, 1
      %v1566 = vor.u32 %v1561, %v1565
      %v1568 = vshll.u32 %v1411, 16
      %v1570 = vrot.slane %v1568, 1
      %v1571 = vsel %vm1415, %v1566, %v1570
      %v1573 = vshrl.u32 %v1364, 16
      %v1575 = vshll.u32 %v1364, 16
      %v1577 = vrot.slane %v1575, 1
      %v1578 = vor.u32 %v1573, %v1577
      %v1580 = vshll.u32 %v1412, 16
      %v1582 = vrot.slane %v1580, 1
      %v1583 = vsel %vm1415, %v1578, %v1582
      %v1585 = vshrl.u32 %v1365, 16
      %v1587 = vshll.u32 %v1365, 16
      %v1589 = vrot.slane %v1587, 1
      %v1590 = vor.u32 %v1585, %v1589
      %v1592 = vshll.u32 %v1413, 16
      %v1594 = vrot.slane %v1592, 1
      %v1595 = vsel %vm1415, %v1590, %v1594
      %v1597 = vshrl.u32 %v1366, 16
      %v1599 = vshll.u32 %v1366, 16
      %v1601 = vrot.slane %v1599, 1
      %v1602 = vor.u32 %v1597, %v1601
      %v1604 = vshll.u32 %v1414, 16
      %v1606 = vrot.slane %v1604, 1
      %v1607 = vsel %vm1415, %v1602, %v1606
      %1608 = vrot.lane.b32.xlu0 %v1427, 4
      %v1609 = vpop.permute.xlu0 %1608
      %1610 = vrot.lane.b32.xlu0 %v1439, 4
      %v1611 = vpop.permute.xlu0 %1610
      %1612 = vrot.lane.b32.xlu0 %v1451, 4
      %v1613 = vpop.permute.xlu0 %1612
      %1614 = vrot.lane.b32.xlu0 %v1463, 4
      %v1615 = vpop.permute.xlu0 %1614
      %1616 = vrot.lane.b32.xlu0 %v1475, 4
      %v1617 = vpop.permute.xlu0 %1616
      %1618 = vrot.lane.b32.xlu0 %v1487, 4
      %v1619 = vpop.permute.xlu0 %1618
      %1620 = vrot.lane.b32.xlu0 %v1499, 4
      %v1621 = vpop.permute.xlu0 %1620
      %1622 = vrot.lane.b32.xlu0 %v1511, 4
      %v1623 = vpop.permute.xlu0 %1622
      %1624 = vrot.lane.b32.xlu0 %v1523, 4
      %v1625 = vpop.permute.xlu0 %1624
      %1626 = vrot.lane.b32.xlu0 %v1535, 4
      %v1627 = vpop.permute.xlu0 %1626
      %1628 = vrot.lane.b32.xlu0 %v1547, 4
      %v1629 = vpop.permute.xlu0 %1628
      %1630 = vrot.lane.b32.xlu0 %v1559, 4
      %v1631 = vpop.permute.xlu0 %1630
      %1632 = vrot.lane.b32.xlu0 %v1571, 4
      %v1633 = vpop.permute.xlu0 %1632
      %1634 = vrot.lane.b32.xlu0 %v1583, 4
      %v1635 = vpop.permute.xlu0 %1634
      %1636 = vrot.lane.b32.xlu0 %v1595, 4
      %v1637 = vpop.permute.xlu0 %1636
      %1638 = vrot.lane.b32.xlu0 %v1607, 4
      %v1639 = vpop.permute.xlu0 %1638
      %v1656 = vunpack.c.l.b16 %v1142
      %v1657 = vunpack.c.l.b16 %v1143
      %v1658 = vunpack.c.l.b16 %v1144
      %v1659 = vunpack.c.l.b16 %v1145
      %v1660 = vunpack.c.l.b16 %v1146
      %v1661 = vunpack.c.l.b16 %v1147
      %v1662 = vunpack.c.l.b16 %v1148
      %v1663 = vunpack.c.l.b16 %v1149
      %v1664 = vunpack.c.l.b16 %v1150
      %v1665 = vunpack.c.l.b16 %v1151
      %v1666 = vunpack.c.l.b16 %v1152
      %v1667 = vunpack.c.l.b16 %v1153
      %v1668 = vunpack.c.l.b16 %v1154
      %v1669 = vunpack.c.l.b16 %v1155
      %v1670 = vunpack.c.l.b16 %v1156
      %v1671 = vunpack.c.l.b16 %v1157
      %v1672 = vpack.c.b16 %v1320, %v1656
      %v1673 = vpack.c.b16 %v1322, %v1657
      %v1674 = vpack.c.b16 %v1324, %v1658
      %v1675 = vpack.c.b16 %v1326, %v1659
      %v1676 = vpack.c.b16 %v1328, %v1660
      %v1677 = vpack.c.b16 %v1330, %v1661
      %v1678 = vpack.c.b16 %v1332, %v1662
      %v1679 = vpack.c.b16 %v1334, %v1663
      %v1680 = vpack.c.b16 %v1336, %v1664
      %v1681 = vpack.c.b16 %v1338, %v1665
      %v1682 = vpack.c.b16 %v1340, %v1666
      %v1683 = vpack.c.b16 %v1342, %v1667
      %v1684 = vpack.c.b16 %v1344, %v1668
      %v1685 = vpack.c.b16 %v1346, %v1669
      %v1686 = vpack.c.b16 %v1348, %v1670
      %v1687 = vpack.c.b16 %v1350, %v1671
      %vm1688 = vcmask 1046528
      %v1689 = vrot.slane %v1672, 1
      %v1690 = vrot.slane %v1399, 1
      %v1691 = vsel %vm1688, %v1689, %v1690
      %v1692 = vrot.slane %v1673, 1
      %v1693 = vrot.slane %v1400, 1
      %v1694 = vsel %vm1688, %v1692, %v1693
      %v1695 = vrot.slane %v1674, 1
      %v1696 = vrot.slane %v1401, 1
      %v1697 = vsel %vm1688, %v1695, %v1696
      %v1698 = vrot.slane %v1675, 1
      %v1699 = vrot.slane %v1402, 1
      %v1700 = vsel %vm1688, %v1698, %v1699
      %v1701 = vrot.slane %v1676, 1
      %v1702 = vrot.slane %v1403, 1
      %v1703 = vsel %vm1688, %v1701, %v1702
      %v1704 = vrot.slane %v1677, 1
      %v1705 = vrot.slane %v1404, 1
      %v1706 = vsel %vm1688, %v1704, %v1705
      %v1707 = vrot.slane %v1678, 1
      %v1708 = vrot.slane %v1405, 1
      %v1709 = vsel %vm1688, %v1707, %v1708
      %v1710 = vrot.slane %v1679, 1
      %v1711 = vrot.slane %v1406, 1
      %v1712 = vsel %vm1688, %v1710, %v1711
      %v1713 = vrot.slane %v1680, 1
      %v1714 = vrot.slane %v1407, 1
      %v1715 = vsel %vm1688, %v1713, %v1714
      %v1716 = vrot.slane %v1681, 1
      %v1717 = vrot.slane %v1408, 1
      %v1718 = vsel %vm1688, %v1716, %v1717
      %v1719 = vrot.slane %v1682, 1
      %v1720 = vrot.slane %v1409, 1
      %v1721 = vsel %vm1688, %v1719, %v1720
      %v1722 = vrot.slane %v1683, 1
      %v1723 = vrot.slane %v1410, 1
      %v1724 = vsel %vm1688, %v1722, %v1723
      %v1725 = vrot.slane %v1684, 1
      %v1726 = vrot.slane %v1411, 1
      %v1727 = vsel %vm1688, %v1725, %v1726
      %v1728 = vrot.slane %v1685, 1
      %v1729 = vrot.slane %v1412, 1
      %v1730 = vsel %vm1688, %v1728, %v1729
      %v1731 = vrot.slane %v1686, 1
      %v1732 = vrot.slane %v1413, 1
      %v1733 = vsel %vm1688, %v1731, %v1732
      %v1734 = vrot.slane %v1687, 1
      %v1735 = vrot.slane %v1414, 1
      %v1736 = vsel %vm1688, %v1734, %v1735
      %1737 = vrot.lane.b32.xlu0 %v1691, 8
      %v1738 = vpop.permute.xlu0 %1737
      %1739 = vrot.lane.b32.xlu0 %v1694, 8
      %v1740 = vpop.permute.xlu0 %1739
      %1741 = vrot.lane.b32.xlu0 %v1697, 8
      %v1742 = vpop.permute.xlu0 %1741
      %1743 = vrot.lane.b32.xlu0 %v1700, 8
      %v1744 = vpop.permute.xlu0 %1743
      %1745 = vrot.lane.b32.xlu0 %v1703, 8
      %v1746 = vpop.permute.xlu0 %1745
      %1747 = vrot.lane.b32.xlu0 %v1706, 8
      %v1748 = vpop.permute.xlu0 %1747
      %1749 = vrot.lane.b32.xlu0 %v1709, 8
      %v1750 = vpop.permute.xlu0 %1749
      %1751 = vrot.lane.b32.xlu0 %v1712, 8
      %v1752 = vpop.permute.xlu0 %1751
      %1753 = vrot.lane.b32.xlu0 %v1715, 8
      %v1754 = vpop.permute.xlu0 %1753
      %1755 = vrot.lane.b32.xlu0 %v1718, 8
      %v1756 = vpop.permute.xlu0 %1755
      %1757 = vrot.lane.b32.xlu0 %v1721, 8
      %v1758 = vpop.permute.xlu0 %1757
      %1759 = vrot.lane.b32.xlu0 %v1724, 8
      %v1760 = vpop.permute.xlu0 %1759
      %1761 = vrot.lane.b32.xlu0 %v1727, 8
      %v1762 = vpop.permute.xlu0 %1761
      %1763 = vrot.lane.b32.xlu0 %v1730, 8
      %v1764 = vpop.permute.xlu0 %1763
      %1765 = vrot.lane.b32.xlu0 %v1733, 8
      %v1766 = vpop.permute.xlu0 %1765
      %1767 = vrot.lane.b32.xlu0 %v1736, 8
      %v1768 = vpop.permute.xlu0 %1767
      %v1801 = vunpack.c.l.b16 %v1158
      %v1802 = vunpack.c.l.b16 %v1159
      %v1803 = vunpack.c.l.b16 %v1160
      %v1804 = vunpack.c.l.b16 %v1161
      %v1805 = vunpack.c.l.b16 %v1162
      %v1806 = vunpack.c.l.b16 %v1163
      %v1807 = vunpack.c.l.b16 %v1164
      %v1808 = vunpack.c.l.b16 %v1165
      %v1809 = vunpack.c.l.b16 %v1166
      %v1810 = vunpack.c.l.b16 %v1167
      %v1811 = vunpack.c.l.b16 %v1168
      %v1812 = vunpack.c.l.b16 %v1169
      %v1813 = vunpack.c.l.b16 %v1170
      %v1814 = vunpack.c.l.b16 %v1171
      %v1815 = vunpack.c.l.b16 %v1172
      %v1816 = vunpack.c.l.b16 %v1173
      %v1817 = vunpack.c.l.b16 %v1174
      %v1818 = vunpack.c.l.b16 %v1175
      %v1819 = vunpack.c.l.b16 %v1176
      %v1820 = vunpack.c.l.b16 %v1177
      %v1821 = vunpack.c.l.b16 %v1178
      %v1822 = vunpack.c.l.b16 %v1179
      %v1823 = vunpack.c.l.b16 %v1180
      %v1824 = vunpack.c.l.b16 %v1181
      %v1825 = vunpack.c.l.b16 %v1182
      %v1826 = vunpack.c.l.b16 %v1183
      %v1827 = vunpack.c.l.b16 %v1184
      %v1828 = vunpack.c.l.b16 %v1185
      %v1829 = vunpack.c.l.b16 %v1186
      %v1830 = vunpack.c.l.b16 %v1187
      %v1831 = vunpack.c.l.b16 %v1188
      %v1832 = vunpack.c.l.b16 %v1189
      %v1833 = vpack.c.b16 %v1802, %v1801
      %v1834 = vpack.c.b16 %v1804, %v1803
      %v1835 = vpack.c.b16 %v1806, %v1805
      %v1836 = vpack.c.b16 %v1808, %v1807
      %v1837 = vpack.c.b16 %v1810, %v1809
      %v1838 = vpack.c.b16 %v1812, %v1811
      %v1839 = vpack.c.b16 %v1814, %v1813
      %v1840 = vpack.c.b16 %v1816, %v1815
      %v1841 = vpack.c.b16 %v1818, %v1817
      %v1842 = vpack.c.b16 %v1820, %v1819
      %v1843 = vpack.c.b16 %v1822, %v1821
      %v1844 = vpack.c.b16 %v1824, %v1823
      %v1845 = vpack.c.b16 %v1826, %v1825
      %v1846 = vpack.c.b16 %v1828, %v1827
      %v1847 = vpack.c.b16 %v1830, %v1829
      %v1848 = vpack.c.b16 %v1832, %v1831
      %1849 = vrot.lane.b32.xlu0 %v1833, 12
      %v1850 = vpop.permute.xlu0 %1849
      %1851 = vrot.lane.b32.xlu0 %v1834, 12
      %v1852 = vpop.permute.xlu0 %1851
      %1853 = vrot.lane.b32.xlu0 %v1835, 12
      %v1854 = vpop.permute.xlu0 %1853
      %1855 = vrot.lane.b32.xlu0 %v1836, 12
      %v1856 = vpop.permute.xlu0 %1855
      %1857 = vrot.lane.b32.xlu0 %v1837, 12
      %v1858 = vpop.permute.xlu0 %1857
      %1859 = vrot.lane.b32.xlu0 %v1838, 12
      %v1860 = vpop.permute.xlu0 %1859
      %1861 = vrot.lane.b32.xlu0 %v1839, 12
      %v1862 = vpop.permute.xlu0 %1861
      %1863 = vrot.lane.b32.xlu0 %v1840, 12
      %v1864 = vpop.permute.xlu0 %1863
      %1865 = vrot.lane.b32.xlu0 %v1841, 12
      %v1866 = vpop.permute.xlu0 %1865
      %1867 = vrot.lane.b32.xlu0 %v1842, 12
      %v1868 = vpop.permute.xlu0 %1867
      %1869 = vrot.lane.b32.xlu0 %v1843, 12
      %v1870 = vpop.permute.xlu0 %1869
      %1871 = vrot.lane.b32.xlu0 %v1844, 12
      %v1872 = vpop.permute.xlu0 %1871
      %1873 = vrot.lane.b32.xlu0 %v1845, 12
      %v1874 = vpop.permute.xlu0 %1873
      %1875 = vrot.lane.b32.xlu0 %v1846, 12
      %v1876 = vpop.permute.xlu0 %1875
      %1877 = vrot.lane.b32.xlu0 %v1847, 12
      %v1878 = vpop.permute.xlu0 %1877
      %1879 = vrot.lane.b32.xlu0 %v1848, 12
      %v1880 = vpop.permute.xlu0 %1879
      %v1897 = vunpack.c.l.b16 %v1190
      %v1898 = vunpack.c.l.b16 %v1191
      %v1899 = vunpack.c.l.b16 %v1192
      %v1900 = vunpack.c.l.b16 %v1193
      %v1901 = vunpack.c.l.b16 %v1194
      %v1902 = vunpack.c.l.b16 %v1195
      %v1903 = vunpack.c.l.b16 %v1196
      %v1904 = vunpack.c.l.b16 %v1197
      %v1905 = vunpack.c.l.b16 %v1198
      %v1906 = vunpack.c.l.b16 %v1199
      %v1907 = vunpack.c.l.b16 %v1200
      %v1908 = vunpack.c.l.b16 %v1201
      %v1909 = vunpack.c.l.b16 %v1202
      %v1910 = vunpack.c.l.b16 %v1203
      %v1911 = vunpack.c.l.b16 %v1204
      %v1912 = vunpack.c.l.b16 %v1205
      %v1913 = vpack.c.b16 %v1897, %v1897
      %v1914 = vpack.c.b16 %v1898, %v1898
      %v1915 = vpack.c.b16 %v1899, %v1899
      %v1916 = vpack.c.b16 %v1900, %v1900
      %v1917 = vpack.c.b16 %v1901, %v1901
      %v1918 = vpack.c.b16 %v1902, %v1902
      %v1919 = vpack.c.b16 %v1903, %v1903
      %v1920 = vpack.c.b16 %v1904, %v1904
      %v1921 = vpack.c.b16 %v1905, %v1905
      %v1922 = vpack.c.b16 %v1906, %v1906
      %v1923 = vpack.c.b16 %v1907, %v1907
      %v1924 = vpack.c.b16 %v1908, %v1908
      %v1925 = vpack.c.b16 %v1909, %v1909
      %v1926 = vpack.c.b16 %v1910, %v1910
      %v1927 = vpack.c.b16 %v1911, %v1911
      %v1928 = vpack.c.b16 %v1912, %v1912
      %v1930 = vshrl.u32 %v1833, 16
      %v1932 = vshll.u32 %v1833, 16
      %v1934 = vrot.slane %v1932, 1
      %v1935 = vor.u32 %v1930, %v1934
      %v1937 = vshll.u32 %v1913, 16
      %v1939 = vrot.slane %v1937, 1
      %v1940 = vsel %vm1415, %v1935, %v1939
      %v1942 = vshrl.u32 %v1834, 16
      %v1944 = vshll.u32 %v1834, 16
      %v1946 = vrot.slane %v1944, 1
      %v1947 = vor.u32 %v1942, %v1946
      %v1949 = vshll.u32 %v1914, 16
      %v1951 = vrot.slane %v1949, 1
      %v1952 = vsel %vm1415, %v1947, %v1951
      %v1954 = vshrl.u32 %v1835, 16
      %v1956 = vshll.u32 %v1835, 16
      %v1958 = vrot.slane %v1956, 1
      %v1959 = vor.u32 %v1954, %v1958
      %v1961 = vshll.u32 %v1915, 16
      %v1963 = vrot.slane %v1961, 1
      %v1964 = vsel %vm1415, %v1959, %v1963
      %v1966 = vshrl.u32 %v1836, 16
      %v1968 = vshll.u32 %v1836, 16
      %v1970 = vrot.slane %v1968, 1
      %v1971 = vor.u32 %v1966, %v1970
      %v1973 = vshll.u32 %v1916, 16
      %v1975 = vrot.slane %v1973, 1
      %v1976 = vsel %vm1415, %v1971, %v1975
      %v1978 = vshrl.u32 %v1837, 16
      %v1980 = vshll.u32 %v1837, 16
      %v1982 = vrot.slane %v1980, 1
      %v1983 = vor.u32 %v1978, %v1982
      %v1985 = vshll.u32 %v1917, 16
      %v1987 = vrot.slane %v1985, 1
      %v1988 = vsel %vm1415, %v1983, %v1987
      %v1990 = vshrl.u32 %v1838, 16
      %v1992 = vshll.u32 %v1838, 16
      %v1994 = vrot.slane %v1992, 1
      %v1995 = vor.u32 %v1990, %v1994
      %v1997 = vshll.u32 %v1918, 16
      %v1999 = vrot.slane %v1997, 1
      %v2000 = vsel %vm1415, %v1995, %v1999
      %v2002 = vshrl.u32 %v1839, 16
      %v2004 = vshll.u32 %v1839, 16
      %v2006 = vrot.slane %v2004, 1
      %v2007 = vor.u32 %v2002, %v2006
      %v2009 = vshll.u32 %v1919, 16
      %v2011 = vrot.slane %v2009, 1
      %v2012 = vsel %vm1415, %v2007, %v2011
      %v2014 = vshrl.u32 %v1840, 16
      %v2016 = vshll.u32 %v1840, 16
      %v2018 = vrot.slane %v2016, 1
      %v2019 = vor.u32 %v2014, %v2018
      %v2021 = vshll.u32 %v1920, 16
      %v2023 = vrot.slane %v2021, 1
      %v2024 = vsel %vm1415, %v2019, %v2023
      %v2026 = vshrl.u32 %v1841, 16
      %v2028 = vshll.u32 %v1841, 16
      %v2030 = vrot.slane %v2028, 1
      %v2031 = vor.u32 %v2026, %v2030
      %v2033 = vshll.u32 %v1921, 16
      %v2035 = vrot.slane %v2033, 1
      %v2036 = vsel %vm1415, %v2031, %v2035
      %v2038 = vshrl.u32 %v1842, 16
      %v2040 = vshll.u32 %v1842, 16
      %v2042 = vrot.slane %v2040, 1
      %v2043 = vor.u32 %v2038, %v2042
      %v2045 = vshll.u32 %v1922, 16
      %v2047 = vrot.slane %v2045, 1
      %v2048 = vsel %vm1415, %v2043, %v2047
      %v2050 = vshrl.u32 %v1843, 16
      %v2052 = vshll.u32 %v1843, 16
      %v2054 = vrot.slane %v2052, 1
      %v2055 = vor.u32 %v2050, %v2054
      %v2057 = vshll.u32 %v1923, 16
      %v2059 = vrot.slane %v2057, 1
      %v2060 = vsel %vm1415, %v2055, %v2059
      %v2062 = vshrl.u32 %v1844, 16
      %v2064 = vshll.u32 %v1844, 16
      %v2066 = vrot.slane %v2064, 1
      %v2067 = vor.u32 %v2062, %v2066
      %v2069 = vshll.u32 %v1924, 16
      %v2071 = vrot.slane %v2069, 1
      %v2072 = vsel %vm1415, %v2067, %v2071
      %v2074 = vshrl.u32 %v1845, 16
      %v2076 = vshll.u32 %v1845, 16
      %v2078 = vrot.slane %v2076, 1
      %v2079 = vor.u32 %v2074, %v2078
      %v2081 = vshll.u32 %v1925, 16
      %v2083 = vrot.slane %v2081, 1
      %v2084 = vsel %vm1415, %v2079, %v2083
      %v2086 = vshrl.u32 %v1846, 16
      %v2088 = vshll.u32 %v1846, 16
      %v2090 = vrot.slane %v2088, 1
      %v2091 = vor.u32 %v2086, %v2090
      %v2093 = vshll.u32 %v1926, 16
      %v2095 = vrot.slane %v2093, 1
      %v2096 = vsel %vm1415, %v2091, %v2095
      %v2098 = vshrl.u32 %v1847, 16
      %v2100 = vshll.u32 %v1847, 16
      %v2102 = vrot.slane %v2100, 1
      %v2103 = vor.u32 %v2098, %v2102
      %v2105 = vshll.u32 %v1927, 16
      %v2107 = vrot.slane %v2105, 1
      %v2108 = vsel %vm1415, %v2103, %v2107
      %v2110 = vshrl.u32 %v1848, 16
      %v2112 = vshll.u32 %v1848, 16
      %v2114 = vrot.slane %v2112, 1
      %v2115 = vor.u32 %v2110, %v2114
      %v2117 = vshll.u32 %v1928, 16
      %v2119 = vrot.slane %v2117, 1
      %v2120 = vsel %vm1415, %v2115, %v2119
      %2121 = vrot.lane.b32.xlu0 %v1940, 16
      %v2122 = vpop.permute.xlu0 %2121
      %2123 = vrot.lane.b32.xlu0 %v1952, 16
      %v2124 = vpop.permute.xlu0 %2123
      %2125 = vrot.lane.b32.xlu0 %v1964, 16
      %v2126 = vpop.permute.xlu0 %2125
      %2127 = vrot.lane.b32.xlu0 %v1976, 16
      %v2128 = vpop.permute.xlu0 %2127
      %2129 = vrot.lane.b32.xlu0 %v1988, 16
      %v2130 = vpop.permute.xlu0 %2129
      %2131 = vrot.lane.b32.xlu0 %v2000, 16
      %v2132 = vpop.permute.xlu0 %2131
      %2133 = vrot.lane.b32.xlu0 %v2012, 16
      %v2134 = vpop.permute.xlu0 %2133
      %2135 = vrot.lane.b32.xlu0 %v2024, 16
      %v2136 = vpop.permute.xlu0 %2135
      %2137 = vrot.lane.b32.xlu0 %v2036, 16
      %v2138 = vpop.permute.xlu0 %2137
      %2139 = vrot.lane.b32.xlu0 %v2048, 16
      %v2140 = vpop.permute.xlu0 %2139
      %2141 = vrot.lane.b32.xlu0 %v2060, 16
      %v2142 = vpop.permute.xlu0 %2141
      %2143 = vrot.lane.b32.xlu0 %v2072, 16
      %v2144 = vpop.permute.xlu0 %2143
      %2145 = vrot.lane.b32.xlu0 %v2084, 16
      %v2146 = vpop.permute.xlu0 %2145
      %2147 = vrot.lane.b32.xlu0 %v2096, 16
      %v2148 = vpop.permute.xlu0 %2147
      %2149 = vrot.lane.b32.xlu0 %v2108, 16
      %v2150 = vpop.permute.xlu0 %2149
      %2151 = vrot.lane.b32.xlu0 %v2120, 16
      %v2152 = vpop.permute.xlu0 %2151
      %v2169 = vunpack.c.l.b16 %v1206
      %v2170 = vunpack.c.l.b16 %v1207
      %v2171 = vunpack.c.l.b16 %v1208
      %v2172 = vunpack.c.l.b16 %v1209
      %v2173 = vunpack.c.l.b16 %v1210
      %v2174 = vunpack.c.l.b16 %v1211
      %v2175 = vunpack.c.l.b16 %v1212
      %v2176 = vunpack.c.l.b16 %v1213
      %v2177 = vunpack.c.l.b16 %v1214
      %v2178 = vunpack.c.l.b16 %v1215
      %v2179 = vunpack.c.l.b16 %v1216
      %v2180 = vunpack.c.l.b16 %v1217
      %v2181 = vunpack.c.l.b16 %v1218
      %v2182 = vunpack.c.l.b16 %v1219
      %v2183 = vunpack.c.l.b16 %v1220
      %v2184 = vunpack.c.l.b16 %v1221
      %v2185 = vpack.c.b16 %v1802, %v2169
      %v2186 = vpack.c.b16 %v1804, %v2170
      %v2187 = vpack.c.b16 %v1806, %v2171
      %v2188 = vpack.c.b16 %v1808, %v2172
      %v2189 = vpack.c.b16 %v1810, %v2173
      %v2190 = vpack.c.b16 %v1812, %v2174
      %v2191 = vpack.c.b16 %v1814, %v2175
      %v2192 = vpack.c.b16 %v1816, %v2176
      %v2193 = vpack.c.b16 %v1818, %v2177
      %v2194 = vpack.c.b16 %v1820, %v2178
      %v2195 = vpack.c.b16 %v1822, %v2179
      %v2196 = vpack.c.b16 %v1824, %v2180
      %v2197 = vpack.c.b16 %v1826, %v2181
      %v2198 = vpack.c.b16 %v1828, %v2182
      %v2199 = vpack.c.b16 %v1830, %v2183
      %v2200 = vpack.c.b16 %v1832, %v2184
      %v2201 = vrot.slane %v2185, 1
      %v2202 = vrot.slane %v1913, 1
      %v2203 = vsel %vm1688, %v2201, %v2202
      %v2204 = vrot.slane %v2186, 1
      %v2205 = vrot.slane %v1914, 1
      %v2206 = vsel %vm1688, %v2204, %v2205
      %v2207 = vrot.slane %v2187, 1
      %v2208 = vrot.slane %v1915, 1
      %v2209 = vsel %vm1688, %v2207, %v2208
      %v2210 = vrot.slane %v2188, 1
      %v2211 = vrot.slane %v1916, 1
      %v2212 = vsel %vm1688, %v2210, %v2211
      %v2213 = vrot.slane %v2189, 1
      %v2214 = vrot.slane %v1917, 1
      %v2215 = vsel %vm1688, %v2213, %v2214
      %v2216 = vrot.slane %v2190, 1
      %v2217 = vrot.slane %v1918, 1
      %v2218 = vsel %vm1688, %v2216, %v2217
      %v2219 = vrot.slane %v2191, 1
      %v2220 = vrot.slane %v1919, 1
      %v2221 = vsel %vm1688, %v2219, %v2220
      %v2222 = vrot.slane %v2192, 1
      %v2223 = vrot.slane %v1920, 1
      %v2224 = vsel %vm1688, %v2222, %v2223
      %v2225 = vrot.slane %v2193, 1
      %v2226 = vrot.slane %v1921, 1
      %v2227 = vsel %vm1688, %v2225, %v2226
      %v2228 = vrot.slane %v2194, 1
      %v2229 = vrot.slane %v1922, 1
      %v2230 = vsel %vm1688, %v2228, %v2229
      %v2231 = vrot.slane %v2195, 1
      %v2232 = vrot.slane %v1923, 1
      %v2233 = vsel %vm1688, %v2231, %v2232
      %v2234 = vrot.slane %v2196, 1
      %v2235 = vrot.slane %v1924, 1
      %v2236 = vsel %vm1688, %v2234, %v2235
      %v2237 = vrot.slane %v2197, 1
      %v2238 = vrot.slane %v1925, 1
      %v2239 = vsel %vm1688, %v2237, %v2238
      %v2240 = vrot.slane %v2198, 1
      %v2241 = vrot.slane %v1926, 1
      %v2242 = vsel %vm1688, %v2240, %v2241
      %v2243 = vrot.slane %v2199, 1
      %v2244 = vrot.slane %v1927, 1
      %v2245 = vsel %vm1688, %v2243, %v2244
      %v2246 = vrot.slane %v2200, 1
      %v2247 = vrot.slane %v1928, 1
      %v2248 = vsel %vm1688, %v2246, %v2247
      %2249 = vrot.lane.b32.xlu0 %v2203, 20
      %v2250 = vpop.permute.xlu0 %2249
      %2251 = vrot.lane.b32.xlu0 %v2206, 20
      %v2252 = vpop.permute.xlu0 %2251
      %2253 = vrot.lane.b32.xlu0 %v2209, 20
      %v2254 = vpop.permute.xlu0 %2253
      %2255 = vrot.lane.b32.xlu0 %v2212, 20
      %v2256 = vpop.permute.xlu0 %2255
      %2257 = vrot.lane.b32.xlu0 %v2215, 20
      %v2258 = vpop.permute.xlu0 %2257
      %2259 = vrot.lane.b32.xlu0 %v2218, 20
      %v2260 = vpop.permute.xlu0 %2259
      %2261 = vrot.lane.b32.xlu0 %v2221, 20
      %v2262 = vpop.permute.xlu0 %2261
      %2263 = vrot.lane.b32.xlu0 %v2224, 20
      %v2264 = vpop.permute.xlu0 %2263
      %2265 = vrot.lane.b32.xlu0 %v2227, 20
      %v2266 = vpop.permute.xlu0 %2265
      %2267 = vrot.lane.b32.xlu0 %v2230, 20
      %v2268 = vpop.permute.xlu0 %2267
      %2269 = vrot.lane.b32.xlu0 %v2233, 20
      %v2270 = vpop.permute.xlu0 %2269
      %2271 = vrot.lane.b32.xlu0 %v2236, 20
      %v2272 = vpop.permute.xlu0 %2271
      %2273 = vrot.lane.b32.xlu0 %v2239, 20
      %v2274 = vpop.permute.xlu0 %2273
      %2275 = vrot.lane.b32.xlu0 %v2242, 20
      %v2276 = vpop.permute.xlu0 %2275
      %2277 = vrot.lane.b32.xlu0 %v2245, 20
      %v2278 = vpop.permute.xlu0 %2277
      %2279 = vrot.lane.b32.xlu0 %v2248, 20
      %v2280 = vpop.permute.xlu0 %2279
      %v2313 = vunpack.c.l.b16 %v1223
      %v2314 = vunpack.c.l.b16 %v1224
      %v2315 = vunpack.c.l.b16 %v1225
      %v2316 = vunpack.c.l.b16 %v1226
      %v2317 = vunpack.c.l.b16 %v1227
      %v2318 = vunpack.c.l.b16 %v1228
      %v2319 = vunpack.c.l.b16 %v1229
      %v2320 = vunpack.c.l.b16 %v1230
      %v2321 = vunpack.c.l.b16 %v1231
      %v2322 = vunpack.c.l.b16 %v1232
      %v2323 = vunpack.c.l.b16 %v1233
      %v2324 = vunpack.c.l.b16 %v1234
      %v2325 = vunpack.c.l.b16 %v1235
      %v2326 = vunpack.c.l.b16 %v1236
      %v2327 = vunpack.c.l.b16 %v1237
      %v2328 = vunpack.c.l.b16 %v1238
      %v2329 = vunpack.c.l.b16 %v1239
      %v2330 = vunpack.c.l.b16 %v1240
      %v2331 = vunpack.c.l.b16 %v1241
      %v2332 = vunpack.c.l.b16 %v1242
      %v2333 = vunpack.c.l.b16 %v1243
      %v2334 = vunpack.c.l.b16 %v1244
      %v2335 = vunpack.c.l.b16 %v1245
      %v2336 = vunpack.c.l.b16 %v1246
      %v2337 = vunpack.c.l.b16 %v1247
      %v2338 = vunpack.c.l.b16 %v1248
      %v2339 = vunpack.c.l.b16 %v1249
      %v2340 = vunpack.c.l.b16 %v1250
      %v2341 = vunpack.c.l.b16 %v1251
      %v2342 = vunpack.c.l.b16 %v1252
      %v2343 = vunpack.c.l.b16 %v1253
      %v2344 = vunpack.c.l.b16 %v1254
      %v2345 = vpack.c.b16 %v2314, %v2313
      %v2346 = vpack.c.b16 %v2316, %v2315
      %v2347 = vpack.c.b16 %v2318, %v2317
      %v2348 = vpack.c.b16 %v2320, %v2319
      %v2349 = vpack.c.b16 %v2322, %v2321
      %v2350 = vpack.c.b16 %v2324, %v2323
      %v2351 = vpack.c.b16 %v2326, %v2325
      %v2352 = vpack.c.b16 %v2328, %v2327
      %v2353 = vpack.c.b16 %v2330, %v2329
      %v2354 = vpack.c.b16 %v2332, %v2331
      %v2355 = vpack.c.b16 %v2334, %v2333
      %v2356 = vpack.c.b16 %v2336, %v2335
      %v2357 = vpack.c.b16 %v2338, %v2337
      %v2358 = vpack.c.b16 %v2340, %v2339
      %v2359 = vpack.c.b16 %v2342, %v2341
      %v2360 = vpack.c.b16 %v2344, %v2343
      %2361 = vrot.lane.b32.xlu0 %v2345, 24
      %v2362 = vpop.permute.xlu0 %2361
      %2363 = vrot.lane.b32.xlu0 %v2346, 24
      %v2364 = vpop.permute.xlu0 %2363
      %2365 = vrot.lane.b32.xlu0 %v2347, 24
      %v2366 = vpop.permute.xlu0 %2365
      %2367 = vrot.lane.b32.xlu0 %v2348, 24
      %v2368 = vpop.permute.xlu0 %2367
      %2369 = vrot.lane.b32.xlu0 %v2349, 24
      %v2370 = vpop.permute.xlu0 %2369
      %2371 = vrot.lane.b32.xlu0 %v2350, 24
      %v2372 = vpop.permute.xlu0 %2371
      %2373 = vrot.lane.b32.xlu0 %v2351, 24
      %v2374 = vpop.permute.xlu0 %2373
      %2375 = vrot.lane.b32.xlu0 %v2352, 24
      %v2376 = vpop.permute.xlu0 %2375
      %2377 = vrot.lane.b32.xlu0 %v2353, 24
      %v2378 = vpop.permute.xlu0 %2377
      %2379 = vrot.lane.b32.xlu0 %v2354, 24
      %v2380 = vpop.permute.xlu0 %2379
      %2381 = vrot.lane.b32.xlu0 %v2355, 24
      %v2382 = vpop.permute.xlu0 %2381
      %2383 = vrot.lane.b32.xlu0 %v2356, 24
      %v2384 = vpop.permute.xlu0 %2383
      %2385 = vrot.lane.b32.xlu0 %v2357, 24
      %v2386 = vpop.permute.xlu0 %2385
      %2387 = vrot.lane.b32.xlu0 %v2358, 24
      %v2388 = vpop.permute.xlu0 %2387
      %2389 = vrot.lane.b32.xlu0 %v2359, 24
      %v2390 = vpop.permute.xlu0 %2389
      %2391 = vrot.lane.b32.xlu0 %v2360, 24
      %v2392 = vpop.permute.xlu0 %2391
      %v2409 = vunpack.c.l.b16 %v1255
      %v2410 = vunpack.c.l.b16 %v1256
      %v2411 = vunpack.c.l.b16 %v1257
      %v2412 = vunpack.c.l.b16 %v1258
      %v2413 = vunpack.c.l.b16 %v1259
      %v2414 = vunpack.c.l.b16 %v1260
      %v2415 = vunpack.c.l.b16 %v1261
      %v2416 = vunpack.c.l.b16 %v1262
      %v2417 = vunpack.c.l.b16 %v1263
      %v2418 = vunpack.c.l.b16 %v1264
      %v2419 = vunpack.c.l.b16 %v1265
      %v2420 = vunpack.c.l.b16 %v1266
      %v2421 = vunpack.c.l.b16 %v1267
      %v2422 = vunpack.c.l.b16 %v1268
      %v2423 = vunpack.c.l.b16 %v1269
      %v2424 = vunpack.c.l.b16 %v1270
      %v2425 = vpack.c.b16 %v2409, %v2409
      %v2426 = vpack.c.b16 %v2410, %v2410
      %v2427 = vpack.c.b16 %v2411, %v2411
      %v2428 = vpack.c.b16 %v2412, %v2412
      %v2429 = vpack.c.b16 %v2413, %v2413
      %v2430 = vpack.c.b16 %v2414, %v2414
      %v2431 = vpack.c.b16 %v2415, %v2415
      %v2432 = vpack.c.b16 %v2416, %v2416
      %v2433 = vpack.c.b16 %v2417, %v2417
      %v2434 = vpack.c.b16 %v2418, %v2418
      %v2435 = vpack.c.b16 %v2419, %v2419
      %v2436 = vpack.c.b16 %v2420, %v2420
      %v2437 = vpack.c.b16 %v2421, %v2421
      %v2438 = vpack.c.b16 %v2422, %v2422
      %v2439 = vpack.c.b16 %v2423, %v2423
      %v2440 = vpack.c.b16 %v2424, %v2424
      %v2442 = vshrl.u32 %v2345, 16
      %v2444 = vshll.u32 %v2345, 16
      %v2446 = vrot.slane %v2444, 1
      %v2447 = vor.u32 %v2442, %v2446
      %v2449 = vshll.u32 %v2425, 16
      %v2451 = vrot.slane %v2449, 1
      %v2452 = vsel %vm1415, %v2447, %v2451
      %v2454 = vshrl.u32 %v2346, 16
      %v2456 = vshll.u32 %v2346, 16
      %v2458 = vrot.slane %v2456, 1
      %v2459 = vor.u32 %v2454, %v2458
      %v2461 = vshll.u32 %v2426, 16
      %v2463 = vrot.slane %v2461, 1
      %v2464 = vsel %vm1415, %v2459, %v2463
      %v2466 = vshrl.u32 %v2347, 16
      %v2468 = vshll.u32 %v2347, 16
      %v2470 = vrot.slane %v2468, 1
      %v2471 = vor.u32 %v2466, %v2470
      %v2473 = vshll.u32 %v2427, 16
      %v2475 = vrot.slane %v2473, 1
      %v2476 = vsel %vm1415, %v2471, %v2475
      %v2478 = vshrl.u32 %v2348, 16
      %v2480 = vshll.u32 %v2348, 16
      %v2482 = vrot.slane %v2480, 1
      %v2483 = vor.u32 %v2478, %v2482
      %v2485 = vshll.u32 %v2428, 16
      %v2487 = vrot.slane %v2485, 1
      %v2488 = vsel %vm1415, %v2483, %v2487
      %v2490 = vshrl.u32 %v2349, 16
      %v2492 = vshll.u32 %v2349, 16
      %v2494 = vrot.slane %v2492, 1
      %v2495 = vor.u32 %v2490, %v2494
      %v2497 = vshll.u32 %v2429, 16
      %v2499 = vrot.slane %v2497, 1
      %v2500 = vsel %vm1415, %v2495, %v2499
      %v2502 = vshrl.u32 %v2350, 16
      %v2504 = vshll.u32 %v2350, 16
      %v2506 = vrot.slane %v2504, 1
      %v2507 = vor.u32 %v2502, %v2506
      %v2509 = vshll.u32 %v2430, 16
      %v2511 = vrot.slane %v2509, 1
      %v2512 = vsel %vm1415, %v2507, %v2511
      %v2514 = vshrl.u32 %v2351, 16
      %v2516 = vshll.u32 %v2351, 16
      %v2518 = vrot.slane %v2516, 1
      %v2519 = vor.u32 %v2514, %v2518
      %v2521 = vshll.u32 %v2431, 16
      %v2523 = vrot.slane %v2521, 1
      %v2524 = vsel %vm1415, %v2519, %v2523
      %v2526 = vshrl.u32 %v2352, 16
      %v2528 = vshll.u32 %v2352, 16
      %v2530 = vrot.slane %v2528, 1
      %v2531 = vor.u32 %v2526, %v2530
      %v2533 = vshll.u32 %v2432, 16
      %v2535 = vrot.slane %v2533, 1
      %v2536 = vsel %vm1415, %v2531, %v2535
      %v2538 = vshrl.u32 %v2353, 16
      %v2540 = vshll.u32 %v2353, 16
      %v2542 = vrot.slane %v2540, 1
      %v2543 = vor.u32 %v2538, %v2542
      %v2545 = vshll.u32 %v2433, 16
      %v2547 = vrot.slane %v2545, 1
      %v2548 = vsel %vm1415, %v2543, %v2547
      %v2550 = vshrl.u32 %v2354, 16
      %v2552 = vshll.u32 %v2354, 16
      %v2554 = vrot.slane %v2552, 1
      %v2555 = vor.u32 %v2550, %v2554
      %v2557 = vshll.u32 %v2434, 16
      %v2559 = vrot.slane %v2557, 1
      %v2560 = vsel %vm1415, %v2555, %v2559
      %v2562 = vshrl.u32 %v2355, 16
      %v2564 = vshll.u32 %v2355, 16
      %v2566 = vrot.slane %v2564, 1
      %v2567 = vor.u32 %v2562, %v2566
      %v2569 = vshll.u32 %v2435, 16
      %v2571 = vrot.slane %v2569, 1
      %v2572 = vsel %vm1415, %v2567, %v2571
      %v2574 = vshrl.u32 %v2356, 16
      %v2576 = vshll.u32 %v2356, 16
      %v2578 = vrot.slane %v2576, 1
      %v2579 = vor.u32 %v2574, %v2578
      %v2581 = vshll.u32 %v2436, 16
      %v2583 = vrot.slane %v2581, 1
      %v2584 = vsel %vm1415, %v2579, %v2583
      %v2586 = vshrl.u32 %v2357, 16
      %v2588 = vshll.u32 %v2357, 16
      %v2590 = vrot.slane %v2588, 1
      %v2591 = vor.u32 %v2586, %v2590
      %v2593 = vshll.u32 %v2437, 16
      %v2595 = vrot.slane %v2593, 1
      %v2596 = vsel %vm1415, %v2591, %v2595
      %v2598 = vshrl.u32 %v2358, 16
      %v2600 = vshll.u32 %v2358, 16
      %v2602 = vrot.slane %v2600, 1
      %v2603 = vor.u32 %v2598, %v2602
      %v2605 = vshll.u32 %v2438, 16
      %v2607 = vrot.slane %v2605, 1
      %v2608 = vsel %vm1415, %v2603, %v2607
      %v2610 = vshrl.u32 %v2359, 16
      %v2612 = vshll.u32 %v2359, 16
      %v2614 = vrot.slane %v2612, 1
      %v2615 = vor.u32 %v2610, %v2614
      %v2617 = vshll.u32 %v2439, 16
      %v2619 = vrot.slane %v2617, 1
      %v2620 = vsel %vm1415, %v2615, %v2619
      %v2622 = vshrl.u32 %v2360, 16
      %v2624 = vshll.u32 %v2360, 16
      %v2626 = vrot.slane %v2624, 1
      %v2627 = vor.u32 %v2622, %v2626
      %v2629 = vshll.u32 %v2440, 16
      %v2631 = vrot.slane %v2629, 1
      %v2632 = vsel %vm1415, %v2627, %v2631
      %2633 = vrot.lane.b32.xlu0 %v2452, 28
      %v2634 = vpop.permute.xlu0 %2633
      %2635 = vrot.lane.b32.xlu0 %v2464, 28
      %v2636 = vpop.permute.xlu0 %2635
      %2637 = vrot.lane.b32.xlu0 %v2476, 28
      %v2638 = vpop.permute.xlu0 %2637
      %2639 = vrot.lane.b32.xlu0 %v2488, 28
      %v2640 = vpop.permute.xlu0 %2639
      %2641 = vrot.lane.b32.xlu0 %v2500, 28
      %v2642 = vpop.permute.xlu0 %2641
      %2643 = vrot.lane.b32.xlu0 %v2512, 28
      %v2644 = vpop.permute.xlu0 %2643
      %2645 = vrot.lane.b32.xlu0 %v2524, 28
      %v2646 = vpop.permute.xlu0 %2645
      %2647 = vrot.lane.b32.xlu0 %v2536, 28
      %v2648 = vpop.permute.xlu0 %2647
      %2649 = vrot.lane.b32.xlu0 %v2548, 28
      %v2650 = vpop.permute.xlu0 %2649
      %2651 = vrot.lane.b32.xlu0 %v2560, 28
      %v2652 = vpop.permute.xlu0 %2651
      %2653 = vrot.lane.b32.xlu0 %v2572, 28
      %v2654 = vpop.permute.xlu0 %2653
      %2655 = vrot.lane.b32.xlu0 %v2584, 28
      %v2656 = vpop.permute.xlu0 %2655
      %2657 = vrot.lane.b32.xlu0 %v2596, 28
      %v2658 = vpop.permute.xlu0 %2657
      %2659 = vrot.lane.b32.xlu0 %v2608, 28
      %v2660 = vpop.permute.xlu0 %2659
      %2661 = vrot.lane.b32.xlu0 %v2620, 28
      %v2662 = vpop.permute.xlu0 %2661
      %2663 = vrot.lane.b32.xlu0 %v2632, 28
      %v2664 = vpop.permute.xlu0 %2663
      %v2681 = vunpack.c.l.b16 %v1271
      %v2682 = vunpack.c.l.b16 %v1272
      %v2683 = vunpack.c.l.b16 %v1273
      %v2684 = vunpack.c.l.b16 %v1274
      %v2685 = vunpack.c.l.b16 %v1275
      %v2686 = vunpack.c.l.b16 %v1276
      %v2687 = vunpack.c.l.b16 %v1277
      %v2688 = vunpack.c.l.b16 %v1278
      %v2689 = vunpack.c.l.b16 %v1279
      %v2690 = vunpack.c.l.b16 %v1280
      %v2691 = vunpack.c.l.b16 %v1281
      %v2692 = vunpack.c.l.b16 %v1282
      %v2693 = vunpack.c.l.b16 %v1283
      %v2694 = vunpack.c.l.b16 %v1284
      %v2695 = vunpack.c.l.b16 %v1285
      %v2696 = vunpack.c.l.b16 %v1286
      %v2697 = vpack.c.b16 %v2314, %v2681
      %v2698 = vpack.c.b16 %v2316, %v2682
      %v2699 = vpack.c.b16 %v2318, %v2683
      %v2700 = vpack.c.b16 %v2320, %v2684
      %v2701 = vpack.c.b16 %v2322, %v2685
      %v2702 = vpack.c.b16 %v2324, %v2686
      %v2703 = vpack.c.b16 %v2326, %v2687
      %v2704 = vpack.c.b16 %v2328, %v2688
      %v2705 = vpack.c.b16 %v2330, %v2689
      %v2706 = vpack.c.b16 %v2332, %v2690
      %v2707 = vpack.c.b16 %v2334, %v2691
      %v2708 = vpack.c.b16 %v2336, %v2692
      %v2709 = vpack.c.b16 %v2338, %v2693
      %v2710 = vpack.c.b16 %v2340, %v2694
      %v2711 = vpack.c.b16 %v2342, %v2695
      %v2712 = vpack.c.b16 %v2344, %v2696
      %v2713 = vrot.slane %v2697, 1
      %v2714 = vrot.slane %v2425, 1
      %v2715 = vsel %vm1688, %v2713, %v2714
      %v2716 = vrot.slane %v2698, 1
      %v2717 = vrot.slane %v2426, 1
      %v2718 = vsel %vm1688, %v2716, %v2717
      %v2719 = vrot.slane %v2699, 1
      %v2720 = vrot.slane %v2427, 1
      %v2721 = vsel %vm1688, %v2719, %v2720
      %v2722 = vrot.slane %v2700, 1
      %v2723 = vrot.slane %v2428, 1
      %v2724 = vsel %vm1688, %v2722, %v2723
      %v2725 = vrot.slane %v2701, 1
      %v2726 = vrot.slane %v2429, 1
      %v2727 = vsel %vm1688, %v2725, %v2726
      %v2728 = vrot.slane %v2702, 1
      %v2729 = vrot.slane %v2430, 1
      %v2730 = vsel %vm1688, %v2728, %v2729
      %v2731 = vrot.slane %v2703, 1
      %v2732 = vrot.slane %v2431, 1
      %v2733 = vsel %vm1688, %v2731, %v2732
      %v2734 = vrot.slane %v2704, 1
      %v2735 = vrot.slane %v2432, 1
      %v2736 = vsel %vm1688, %v2734, %v2735
      %v2737 = vrot.slane %v2705, 1
      %v2738 = vrot.slane %v2433, 1
      %v2739 = vsel %vm1688, %v2737, %v2738
      %v2740 = vrot.slane %v2706, 1
      %v2741 = vrot.slane %v2434, 1
      %v2742 = vsel %vm1688, %v2740, %v2741
      %v2743 = vrot.slane %v2707, 1
      %v2744 = vrot.slane %v2435, 1
      %v2745 = vsel %vm1688, %v2743, %v2744
      %v2746 = vrot.slane %v2708, 1
      %v2747 = vrot.slane %v2436, 1
      %v2748 = vsel %vm1688, %v2746, %v2747
      %v2749 = vrot.slane %v2709, 1
      %v2750 = vrot.slane %v2437, 1
      %v2751 = vsel %vm1688, %v2749, %v2750
      %v2752 = vrot.slane %v2710, 1
      %v2753 = vrot.slane %v2438, 1
      %v2754 = vsel %vm1688, %v2752, %v2753
      %v2755 = vrot.slane %v2711, 1
      %v2756 = vrot.slane %v2439, 1
      %v2757 = vsel %vm1688, %v2755, %v2756
      %v2758 = vrot.slane %v2712, 1
      %v2759 = vrot.slane %v2440, 1
      %v2760 = vsel %vm1688, %v2758, %v2759
      %2761 = vrot.lane.b32.xlu0 %v2715, 32
      %v2762 = vpop.permute.xlu0 %2761
      %2763 = vrot.lane.b32.xlu0 %v2718, 32
      %v2764 = vpop.permute.xlu0 %2763
      %2765 = vrot.lane.b32.xlu0 %v2721, 32
      %v2766 = vpop.permute.xlu0 %2765
      %2767 = vrot.lane.b32.xlu0 %v2724, 32
      %v2768 = vpop.permute.xlu0 %2767
      %2769 = vrot.lane.b32.xlu0 %v2727, 32
      %v2770 = vpop.permute.xlu0 %2769
      %2771 = vrot.lane.b32.xlu0 %v2730, 32
      %v2772 = vpop.permute.xlu0 %2771
      %2773 = vrot.lane.b32.xlu0 %v2733, 32
      %v2774 = vpop.permute.xlu0 %2773
      %2775 = vrot.lane.b32.xlu0 %v2736, 32
      %v2776 = vpop.permute.xlu0 %2775
      %2777 = vrot.lane.b32.xlu0 %v2739, 32
      %v2778 = vpop.permute.xlu0 %2777
      %2779 = vrot.lane.b32.xlu0 %v2742, 32
      %v2780 = vpop.permute.xlu0 %2779
      %2781 = vrot.lane.b32.xlu0 %v2745, 32
      %v2782 = vpop.permute.xlu0 %2781
      %2783 = vrot.lane.b32.xlu0 %v2748, 32
      %v2784 = vpop.permute.xlu0 %2783
      %2785 = vrot.lane.b32.xlu0 %v2751, 32
      %v2786 = vpop.permute.xlu0 %2785
      %2787 = vrot.lane.b32.xlu0 %v2754, 32
      %v2788 = vpop.permute.xlu0 %2787
      %2789 = vrot.lane.b32.xlu0 %v2757, 32
      %v2790 = vpop.permute.xlu0 %2789
      %2791 = vrot.lane.b32.xlu0 %v2760, 32
      %v2792 = vpop.permute.xlu0 %2791
      %vm2793 = vcmask 31744
      %v2795 = vsel %vm2793, %v1351, %v1609
      %v2797 = vsel %vm2793, %v1352, %v1611
      %v2799 = vsel %vm2793, %v1353, %v1613
      %v2801 = vsel %vm2793, %v1354, %v1615
      %v2803 = vsel %vm2793, %v1355, %v1617
      %v2805 = vsel %vm2793, %v1356, %v1619
      %v2807 = vsel %vm2793, %v1357, %v1621
      %v2809 = vsel %vm2793, %v1358, %v1623
      %v2811 = vsel %vm2793, %v1359, %v1625
      %v2813 = vsel %vm2793, %v1360, %v1627
      %v2815 = vsel %vm2793, %v1361, %v1629
      %v2817 = vsel %vm2793, %v1362, %v1631
      %v2819 = vsel %vm2793, %v1363, %v1633
      %v2821 = vsel %vm2793, %v1364, %v1635
      %v2823 = vsel %vm2793, %v1365, %v1637
      %v2825 = vsel %vm2793, %v1366, %v1639
      %vm2826 = vcmask 64512
      %v2828 = vsel %vm2826, %v2795, %v1738
      %v2830 = vsel %vm2826, %v2797, %v1740
      %v2832 = vsel %vm2826, %v2799, %v1742
      %v2834 = vsel %vm2826, %v2801, %v1744
      %v2836 = vsel %vm2826, %v2803, %v1746
      %v2838 = vsel %vm2826, %v2805, %v1748
      %v2840 = vsel %vm2826, %v2807, %v1750
      %v2842 = vsel %vm2826, %v2809, %v1752
      %v2844 = vsel %vm2826, %v2811, %v1754
      %v2846 = vsel %vm2826, %v2813, %v1756
      %v2848 = vsel %vm2826, %v2815, %v1758
      %v2850 = vsel %vm2826, %v2817, %v1760
      %v2852 = vsel %vm2826, %v2819, %v1762
      %v2854 = vsel %vm2826, %v2821, %v1764
      %v2856 = vsel %vm2826, %v2823, %v1766
      %v2858 = vsel %vm2826, %v2825, %v1768
      %vm2859 = vcmask 97280
      %v2861 = vsel %vm2859, %v2828, %v1850
      %v2863 = vsel %vm2859, %v2830, %v1852
      %v2865 = vsel %vm2859, %v2832, %v1854
      %v2867 = vsel %vm2859, %v2834, %v1856
      %v2869 = vsel %vm2859, %v2836, %v1858
      %v2871 = vsel %vm2859, %v2838, %v1860
      %v2873 = vsel %vm2859, %v2840, %v1862
      %v2875 = vsel %vm2859, %v2842, %v1864
      %v2877 = vsel %vm2859, %v2844, %v1866
      %v2879 = vsel %vm2859, %v2846, %v1868
      %v2881 = vsel %vm2859, %v2848, %v1870
      %v2883 = vsel %vm2859, %v2850, %v1872
      %v2885 = vsel %vm2859, %v2852, %v1874
      %v2887 = vsel %vm2859, %v2854, %v1876
      %v2889 = vsel %vm2859, %v2856, %v1878
      %v2891 = vsel %vm2859, %v2858, %v1880
      %vm2892 = vcmask 130048
      %v2894 = vsel %vm2892, %v2861, %v2122
      %v2896 = vsel %vm2892, %v2863, %v2124
      %v2898 = vsel %vm2892, %v2865, %v2126
      %v2900 = vsel %vm2892, %v2867, %v2128
      %v2902 = vsel %vm2892, %v2869, %v2130
      %v2904 = vsel %vm2892, %v2871, %v2132
      %v2906 = vsel %vm2892, %v2873, %v2134
      %v2908 = vsel %vm2892, %v2875, %v2136
      %v2910 = vsel %vm2892, %v2877, %v2138
      %v2912 = vsel %vm2892, %v2879, %v2140
      %v2914 = vsel %vm2892, %v2881, %v2142
      %v2916 = vsel %vm2892, %v2883, %v2144
      %v2918 = vsel %vm2892, %v2885, %v2146
      %v2920 = vsel %vm2892, %v2887, %v2148
      %v2922 = vsel %vm2892, %v2889, %v2150
      %v2924 = vsel %vm2892, %v2891, %v2152
      %vm2925 = vcmask 162816
      %v2927 = vsel %vm2925, %v2894, %v2250
      %v2929 = vsel %vm2925, %v2896, %v2252
      %v2931 = vsel %vm2925, %v2898, %v2254
      %v2933 = vsel %vm2925, %v2900, %v2256
      %v2935 = vsel %vm2925, %v2902, %v2258
      %v2937 = vsel %vm2925, %v2904, %v2260
      %v2939 = vsel %vm2925, %v2906, %v2262
      %v2941 = vsel %vm2925, %v2908, %v2264
      %v2943 = vsel %vm2925, %v2910, %v2266
      %v2945 = vsel %vm2925, %v2912, %v2268
      %v2947 = vsel %vm2925, %v2914, %v2270
      %v2949 = vsel %vm2925, %v2916, %v2272
      %v2951 = vsel %vm2925, %v2918, %v2274
      %v2953 = vsel %vm2925, %v2920, %v2276
      %v2955 = vsel %vm2925, %v2922, %v2278
      %v2957 = vsel %vm2925, %v2924, %v2280
      %vm2958 = vcmask 195584
      %v2960 = vsel %vm2958, %v2927, %v2362
      %v2962 = vsel %vm2958, %v2929, %v2364
      %v2964 = vsel %vm2958, %v2931, %v2366
      %v2966 = vsel %vm2958, %v2933, %v2368
      %v2968 = vsel %vm2958, %v2935, %v2370
      %v2970 = vsel %vm2958, %v2937, %v2372
      %v2972 = vsel %vm2958, %v2939, %v2374
      %v2974 = vsel %vm2958, %v2941, %v2376
      %v2976 = vsel %vm2958, %v2943, %v2378
      %v2978 = vsel %vm2958, %v2945, %v2380
      %v2980 = vsel %vm2958, %v2947, %v2382
      %v2982 = vsel %vm2958, %v2949, %v2384
      %v2984 = vsel %vm2958, %v2951, %v2386
      %v2986 = vsel %vm2958, %v2953, %v2388
      %v2988 = vsel %vm2958, %v2955, %v2390
      %v2990 = vsel %vm2958, %v2957, %v2392
      %vm2991 = vcmask 228352
      %v2993 = vsel %vm2991, %v2960, %v2634
      %v2995 = vsel %vm2991, %v2962, %v2636
      %v2997 = vsel %vm2991, %v2964, %v2638
      %v2999 = vsel %vm2991, %v2966, %v2640
      %v3001 = vsel %vm2991, %v2968, %v2642
      %v3003 = vsel %vm2991, %v2970, %v2644
      %v3005 = vsel %vm2991, %v2972, %v2646
      %v3007 = vsel %vm2991, %v2974, %v2648
      %v3009 = vsel %vm2991, %v2976, %v2650
      %v3011 = vsel %vm2991, %v2978, %v2652
      %v3013 = vsel %vm2991, %v2980, %v2654
      %v3015 = vsel %vm2991, %v2982, %v2656
      %v3017 = vsel %vm2991, %v2984, %v2658
      %v3019 = vsel %vm2991, %v2986, %v2660
      %v3021 = vsel %vm2991, %v2988, %v2662
      %v3023 = vsel %vm2991, %v2990, %v2664
      %vm3024 = vcmask 261120
      %v3026 = vsel %vm3024, %v2993, %v2762
      %v3028 = vsel %vm3024, %v2995, %v2764
      %v3030 = vsel %vm3024, %v2997, %v2766
      %v3032 = vsel %vm3024, %v2999, %v2768
      %v3034 = vsel %vm3024, %v3001, %v2770
      %v3036 = vsel %vm3024, %v3003, %v2772
      %v3038 = vsel %vm3024, %v3005, %v2774
      %v3040 = vsel %vm3024, %v3007, %v2776
      %v3042 = vsel %vm3024, %v3009, %v2778
      %v3044 = vsel %vm3024, %v3011, %v2780
      %v3046 = vsel %vm3024, %v3013, %v2782
      %v3048 = vsel %vm3024, %v3015, %v2784
      %v3050 = vsel %vm3024, %v3017, %v2786
      %v3052 = vsel %vm3024, %v3019, %v2788
      %v3054 = vsel %vm3024, %v3021, %v2790
      %v3056 = vsel %vm3024, %v3023, %v2792
      %v3057 = vld [vmem:[%s421] sm:$0xf]
      %v3058 = vld [vmem:[%s421 + $0x4] sm:$0xf]
      %v3059 = vld [vmem:[%s421 + $0x8] sm:$0xf]
      %v3060 = vld [vmem:[%s421 + $0xc] sm:$0xf]
      %v3061 = vld [vmem:[%s421 + $0x10] sm:$0x3]
      %v3062 = vld [vmem:[%s424] sm:$0x1]
      %v3064 = vlaneseq
      %v3065 = vshrl.u32 %v3064, 7
      %v3066 = vsub.s32 0, %v3065
      %v3067 = vrot.slane %v3062, %v3066
      %v3074 = vunpack.c.l.b16 %v3057
      %v3075 = vunpack.c.l.b16 %v3058
      %v3076 = vunpack.c.l.b16 %v3059
      %v3077 = vunpack.c.l.b16 %v3060
      %v3078 = vunpack.c.l.b16 %v3061
      %v3079 = vpack.c.b16 %v3075, %v3074
      %v3080 = vpack.c.b16 %v3077, %v3076
      %v3081 = vpack.c.b16 %v3078, %v3078
      %vm3084 = vcmask 293888
      %v3085 = vsel %vm3084, %v3026, 0
      %v3087 = vsel %vm3084, %v3028, 0
      %v3089 = vsel %vm3084, %v3030, 0
      %v3091 = vsel %vm3084, %v3032, 0
      %v3093 = vsel %vm3084, %v3034, 0
      %v3095 = vsel %vm3084, %v3036, 0
      %v3097 = vsel %vm3084, %v3038, 0
      %v3099 = vsel %vm3084, %v3040, 0
      %v3101 = vsel %vm3084, %v3042, 0
      %v3103 = vsel %vm3084, %v3044, 0
      %v3105 = vsel %vm3084, %v3046, 0
      %v3107 = vsel %vm3084, %v3048, 0
      %v3109 = vsel %vm3084, %v3050, 0
      %v3111 = vsel %vm3084, %v3052, 0
      %v3113 = vsel %vm3084, %v3054, 0
      %v3115 = vsel %vm3084, %v3056, 0
      %vm3117 = vcmask 1041408
      %v3119 = vsel %vm3117, %v3081, 0
      %3121 = vmatprep.subr.bf16.mxu0 0
      %3122 = vmatpush1.bf16.msra.mxu0 0
      %3123 = vmatprep.subr.bf16.mxu0 0
      %3124 = vmatpush1.bf16.msra.mxu0 0
      %3125 = vmatprep.subr.bf16.mxu0 0
      %3126 = vmatpush1.bf16.msra.mxu0 0
      %3127 = vmatprep.subr.bf16.mxu0 0
      %3128 = vmatpush1.bf16.msra.mxu0 0
      %3129 = vmatprep.subr.bf16.mxu0 0
      %3130 = vmatpush1.bf16.msra.mxu0 0
      %3131 = vmatprep.subr.bf16.mxu0 0
      %3132 = vmatpush1.bf16.msra.mxu0 %v3119
      %3133 = vmatprep.subr.bf16.mxu0 0
      %3134 = vmatpush1.bf16.msra.mxu0 %v3080
      %3135 = vmatprep.subr.bf16.mxu0 0
      %3136 = vmatpush1.bf16.msra.mxu0 %v3079
      %3137 = vmatprep.subr.bf16.mxu0 0
      %3138 = vmatpush2.bf16.msra.mxu0 0
      %3139 = vmatprep.subr.bf16.mxu0 0
      %3140 = vmatpush2.bf16.msra.mxu0 0
      %3141 = vmatprep.subr.bf16.mxu0 0
      %3142 = vmatpush2.bf16.msra.mxu0 0
      %3143 = vmatprep.subr.bf16.mxu0 0
      %3144 = vmatpush2.bf16.msra.mxu0 0
      %3145 = vmatprep.subr.bf16.mxu0 0
      %3146 = vmatpush2.bf16.msra.mxu0 0
      %3147 = vmatprep.subr.bf16.mxu0 0
      %3148 = vmatpush2.bf16.msra.mxu0 0
      %3149 = vmatprep.subr.bf16.mxu0 0
      %3150 = vmatpush2.bf16.msra.mxu0 0
      %3151 = vmatprep.subr.bf16.mxu0 0
      %3152 = vmatpush2.bf16.msra.mxu0 0
      %3153 = vmatprep.mubr.bf16.mxu0 0
      %3154 = vmatmul.mubr.bf16.gmra.mxu0 %v3085
      %v3155 = vpop.f32.mrf.mxu0
      %v3156 = vadd.f32 %v3067, %v3155
      %v3157 = vpop.f32.mrf.mxu0
      %v3158 = vpop.f32.mrf.mxu0
      %v3159 = vadd.f32 %v3067, %v3158
      %v3160 = vpop.f32.mrf.mxu0
      %3161 = vmatprep.mubr.bf16.mxu0 0
      %3162 = vmatmul.mubr.bf16.gmra.mxu0 %v3087
      %v3163 = vpop.f32.mrf.mxu0
      %v3164 = vadd.f32 %v3067, %v3163
      %v3165 = vpop.f32.mrf.mxu0
      %v3166 = vpop.f32.mrf.mxu0
      %v3167 = vadd.f32 %v3067, %v3166
      %v3168 = vpop.f32.mrf.mxu0
      %3169 = vmatprep.mubr.bf16.mxu0 0
      %3170 = vmatmul.mubr.bf16.gmra.mxu0 %v3089
      %v3171 = vpop.f32.mrf.mxu0
      %v3172 = vadd.f32 %v3067, %v3171
      %v3173 = vpop.f32.mrf.mxu0
      %v3174 = vpop.f32.mrf.mxu0
      %v3175 = vadd.f32 %v3067, %v3174
      %v3176 = vpop.f32.mrf.mxu0
      %3177 = vmatprep.mubr.bf16.mxu0 0
      %3178 = vmatmul.mubr.bf16.gmra.mxu0 %v3091
      %v3179 = vpop.f32.mrf.mxu0
      %v3180 = vadd.f32 %v3067, %v3179
      %v3181 = vpop.f32.mrf.mxu0
      %v3182 = vpop.f32.mrf.mxu0
      %v3183 = vadd.f32 %v3067, %v3182
      %v3184 = vpop.f32.mrf.mxu0
      %3185 = vmatprep.mubr.bf16.mxu0 0
      %3186 = vmatmul.mubr.bf16.gmra.mxu0 %v3093
      %v3187 = vpop.f32.mrf.mxu0
      %v3188 = vadd.f32 %v3067, %v3187
      %v3189 = vpop.f32.mrf.mxu0
      %v3190 = vpop.f32.mrf.mxu0
      %v3191 = vadd.f32 %v3067, %v3190
      %v3192 = vpop.f32.mrf.mxu0
      %3193 = vmatprep.mubr.bf16.mxu0 0
      %3194 = vmatmul.mubr.bf16.gmra.mxu0 %v3095
      %v3195 = vpop.f32.mrf.mxu0
      %v3196 = vadd.f32 %v3067, %v3195
      %v3197 = vpop.f32.mrf.mxu0
      %v3198 = vpop.f32.mrf.mxu0
      %v3199 = vadd.f32 %v3067, %v3198
      %v3200 = vpop.f32.mrf.mxu0
      %3201 = vmatprep.mubr.bf16.mxu0 0
      %3202 = vmatmul.mubr.bf16.gmra.mxu0 %v3097
      %v3203 = vpop.f32.mrf.mxu0
      %v3204 = vadd.f32 %v3067, %v3203
      %v3205 = vpop.f32.mrf.mxu0
      %v3206 = vpop.f32.mrf.mxu0
      %v3207 = vadd.f32 %v3067, %v3206
      %v3208 = vpop.f32.mrf.mxu0
      %3209 = vmatprep.mubr.bf16.mxu0 0
      %3210 = vmatmul.mubr.bf16.gmra.mxu0 %v3099
      %v3211 = vpop.f32.mrf.mxu0
      %v3212 = vadd.f32 %v3067, %v3211
      %v3213 = vpop.f32.mrf.mxu0
      %v3214 = vpop.f32.mrf.mxu0
      %v3215 = vadd.f32 %v3067, %v3214
      %v3216 = vpop.f32.mrf.mxu0
      %3217 = vmatprep.mubr.bf16.mxu0 0
      %3218 = vmatmul.mubr.bf16.gmra.mxu0 %v3101
      %v3219 = vpop.f32.mrf.mxu0
      %v3220 = vadd.f32 %v3067, %v3219
      %v3221 = vpop.f32.mrf.mxu0
      %v3222 = vpop.f32.mrf.mxu0
      %v3223 = vadd.f32 %v3067, %v3222
      %v3224 = vpop.f32.mrf.mxu0
      %3225 = vmatprep.mubr.bf16.mxu0 0
      %3226 = vmatmul.mubr.bf16.gmra.mxu0 %v3103
      %v3227 = vpop.f32.mrf.mxu0
      %v3228 = vadd.f32 %v3067, %v3227
      %v3229 = vpop.f32.mrf.mxu0
      %v3230 = vpop.f32.mrf.mxu0
      %v3231 = vadd.f32 %v3067, %v3230
      %v3232 = vpop.f32.mrf.mxu0
      %3233 = vmatprep.mubr.bf16.mxu0 0
      %3234 = vmatmul.mubr.bf16.gmra.mxu0 %v3105
      %v3235 = vpop.f32.mrf.mxu0
      %v3236 = vadd.f32 %v3067, %v3235
      %v3237 = vpop.f32.mrf.mxu0
      %v3238 = vpop.f32.mrf.mxu0
      %v3239 = vadd.f32 %v3067, %v3238
      %v3240 = vpop.f32.mrf.mxu0
      %3241 = vmatprep.mubr.bf16.mxu0 0
      %3242 = vmatmul.mubr.bf16.gmra.mxu0 %v3107
      %v3243 = vpop.f32.mrf.mxu0
      %v3244 = vadd.f32 %v3067, %v3243
      %v3245 = vpop.f32.mrf.mxu0
      %v3246 = vpop.f32.mrf.mxu0
      %v3247 = vadd.f32 %v3067, %v3246
      %v3248 = vpop.f32.mrf.mxu0
      %3249 = vmatprep.mubr.bf16.mxu0 0
      %3250 = vmatmul.mubr.bf16.gmra.mxu0 %v3109
      %v3251 = vpop.f32.mrf.mxu0
      %v3252 = vadd.f32 %v3067, %v3251
      %v3253 = vpop.f32.mrf.mxu0
      %v3254 = vpop.f32.mrf.mxu0
      %v3255 = vadd.f32 %v3067, %v3254
      %v3256 = vpop.f32.mrf.mxu0
      %3257 = vmatprep.mubr.bf16.mxu0 0
      %3258 = vmatmul.mubr.bf16.gmra.mxu0 %v3111
      %v3259 = vpop.f32.mrf.mxu0
      %v3260 = vadd.f32 %v3067, %v3259
      %v3261 = vpop.f32.mrf.mxu0
      %v3262 = vpop.f32.mrf.mxu0
      %v3263 = vadd.f32 %v3067, %v3262
      %v3264 = vpop.f32.mrf.mxu0
      %3265 = vmatprep.mubr.bf16.mxu0 0
      %3266 = vmatmul.mubr.bf16.gmra.mxu0 %v3113
      %v3267 = vpop.f32.mrf.mxu0
      %v3268 = vadd.f32 %v3067, %v3267
      %v3269 = vpop.f32.mrf.mxu0
      %v3270 = vpop.f32.mrf.mxu0
      %v3271 = vadd.f32 %v3067, %v3270
      %v3272 = vpop.f32.mrf.mxu0
      %3273 = vmatprep.mubr.bf16.mxu0 0
      %3274 = vmatmul.mubr.bf16.gmra.mxu0 %v3115
      %v3275 = vpop.f32.mrf.mxu0
      %v3276 = vadd.f32 %v3067, %v3275
      %v3277 = vpop.f32.mrf.mxu0
      %v3278 = vpop.f32.mrf.mxu0
      %v3279 = vadd.f32 %v3067, %v3278
      %v3280 = vpop.f32.mrf.mxu0
      %3281 = vdwg.mxu0
      %v3282 = vmax.f32 %v3156, 0.0
      %v3283 = vmax.f32 %v3159, 0.0
      %v3284 = vmax.f32 %v3164, 0.0
      %v3285 = vmax.f32 %v3167, 0.0
      %v3286 = vmax.f32 %v3172, 0.0
      %v3287 = vmax.f32 %v3175, 0.0
      %v3288 = vmax.f32 %v3180, 0.0
      %v3289 = vmax.f32 %v3183, 0.0
      %v3290 = vmax.f32 %v3188, 0.0
      %v3291 = vmax.f32 %v3191, 0.0
      %v3292 = vmax.f32 %v3196, 0.0
      %v3293 = vmax.f32 %v3199, 0.0
      %v3294 = vmax.f32 %v3204, 0.0
      %v3295 = vmax.f32 %v3207, 0.0
      %v3296 = vmax.f32 %v3212, 0.0
      %v3297 = vmax.f32 %v3215, 0.0
      %v3298 = vmax.f32 %v3220, 0.0
      %v3299 = vmax.f32 %v3223, 0.0
      %v3300 = vmax.f32 %v3228, 0.0
      %v3301 = vmax.f32 %v3231, 0.0
      %v3302 = vmax.f32 %v3236, 0.0
      %v3303 = vmax.f32 %v3239, 0.0
      %v3304 = vmax.f32 %v3244, 0.0
      %v3305 = vmax.f32 %v3247, 0.0
      %v3306 = vmax.f32 %v3252, 0.0
      %v3307 = vmax.f32 %v3255, 0.0
      %v3308 = vmax.f32 %v3260, 0.0
      %v3309 = vmax.f32 %v3263, 0.0
      %v3310 = vmax.f32 %v3268, 0.0
      %v3311 = vmax.f32 %v3271, 0.0
      %v3312 = vmax.f32 %v3276, 0.0
      %v3313 = vmax.f32 %v3279, 0.0
      %v3314 = vpack.c.bf16 %v3283, %v3282
      %v3315 = vpack.c.bf16 %v3285, %v3284
      %v3316 = vpack.c.bf16 %v3287, %v3286
      %v3317 = vpack.c.bf16 %v3289, %v3288
      %v3318 = vpack.c.bf16 %v3291, %v3290
      %v3319 = vpack.c.bf16 %v3293, %v3292
      %v3320 = vpack.c.bf16 %v3295, %v3294
      %v3321 = vpack.c.bf16 %v3297, %v3296
      %v3322 = vpack.c.bf16 %v3299, %v3298
      %v3323 = vpack.c.bf16 %v3301, %v3300
      %v3324 = vpack.c.bf16 %v3303, %v3302
      %v3325 = vpack.c.bf16 %v3305, %v3304
      %v3326 = vpack.c.bf16 %v3307, %v3306
      %v3327 = vpack.c.bf16 %v3309, %v3308
      %v3328 = vpack.c.bf16 %v3311, %v3310
      %v3329 = vpack.c.bf16 %v3313, %v3312
      %v3346 = vunpack.c.l.b16 %v3314
      %v3347 = vunpack.c.h.b16 %v3314
      %v3348 = vunpack.c.l.b16 %v3315
      %v3349 = vunpack.c.h.b16 %v3315
      %v3350 = vunpack.c.l.b16 %v3316
      %v3351 = vunpack.c.h.b16 %v3316
      %v3352 = vunpack.c.l.b16 %v3317
      %v3353 = vunpack.c.h.b16 %v3317
      %v3354 = vunpack.c.l.b16 %v3318
      %v3355 = vunpack.c.h.b16 %v3318
      %v3356 = vunpack.c.l.b16 %v3319
      %v3357 = vunpack.c.h.b16 %v3319
      %v3358 = vunpack.c.l.b16 %v3320
      %v3359 = vunpack.c.h.b16 %v3320
      %v3360 = vunpack.c.l.b16 %v3321
      %v3361 = vunpack.c.h.b16 %v3321
      %v3362 = vunpack.c.l.b16 %v3322
      %v3363 = vunpack.c.h.b16 %v3322
      %v3364 = vunpack.c.l.b16 %v3323
      %v3365 = vunpack.c.h.b16 %v3323
      %v3366 = vunpack.c.l.b16 %v3324
      %v3367 = vunpack.c.h.b16 %v3324
      %v3368 = vunpack.c.l.b16 %v3325
      %v3369 = vunpack.c.h.b16 %v3325
      %v3370 = vunpack.c.l.b16 %v3326
      %v3371 = vunpack.c.h.b16 %v3326
      %v3372 = vunpack.c.l.b16 %v3327
      %v3373 = vunpack.c.h.b16 %v3327
      %v3374 = vunpack.c.l.b16 %v3328
      %v3375 = vunpack.c.h.b16 %v3328
      %v3376 = vunpack.c.l.b16 %v3329
      %v3377 = vunpack.c.h.b16 %v3329
      %v3378 = vpack.c.b16 %v3346, %v3346
      %v3379 = vpack.c.b16 %v3347, %v3347
      %v3380 = vpack.c.b16 %v3348, %v3348
      %v3381 = vpack.c.b16 %v3349, %v3349
      %v3382 = vpack.c.b16 %v3350, %v3350
      %v3383 = vpack.c.b16 %v3351, %v3351
      %v3384 = vpack.c.b16 %v3352, %v3352
      %v3385 = vpack.c.b16 %v3353, %v3353
      %v3386 = vpack.c.b16 %v3354, %v3354
      %v3387 = vpack.c.b16 %v3355, %v3355
      %v3388 = vpack.c.b16 %v3356, %v3356
      %v3389 = vpack.c.b16 %v3357, %v3357
      %v3390 = vpack.c.b16 %v3358, %v3358
      %v3391 = vpack.c.b16 %v3359, %v3359
      %v3392 = vpack.c.b16 %v3360, %v3360
      %v3393 = vpack.c.b16 %v3361, %v3361
      %v3394 = vpack.c.b16 %v3362, %v3362
      %v3395 = vpack.c.b16 %v3363, %v3363
      %v3396 = vpack.c.b16 %v3364, %v3364
      %v3397 = vpack.c.b16 %v3365, %v3365
      %v3398 = vpack.c.b16 %v3366, %v3366
      %v3399 = vpack.c.b16 %v3367, %v3367
      %v3400 = vpack.c.b16 %v3368, %v3368
      %v3401 = vpack.c.b16 %v3369, %v3369
      %v3402 = vpack.c.b16 %v3370, %v3370
      %v3403 = vpack.c.b16 %v3371, %v3371
      %v3404 = vpack.c.b16 %v3372, %v3372
      %v3405 = vpack.c.b16 %v3373, %v3373
      %v3406 = vpack.c.b16 %v3374, %v3374
      %v3407 = vpack.c.b16 %v3375, %v3375
      %v3408 = vpack.c.b16 %v3376, %v3376
      %v3409 = vpack.c.b16 %v3377, %v3377
      %vm3442 = vcmask 60416
      %3443 = vst.msk [vmem:[%s437] sm:$0xf] %vm3442, %v3378
      %3444 = vst.msk [vmem:[%s437 + $0x4] sm:$0xf] %vm3442, %v3379
      %3445 = vst.msk [vmem:[%s437 + $0x8] sm:$0xf] %vm3442, %v3380
      %3446 = vst.msk [vmem:[%s437 + $0xc] sm:$0xf] %vm3442, %v3381
      %3447 = vst.msk [vmem:[%s437 + $0x10] sm:$0xf] %vm3442, %v3382
      %3448 = vst.msk [vmem:[%s437 + $0x14] sm:$0xf] %vm3442, %v3383
      %3449 = vst.msk [vmem:[%s437 + $0x18] sm:$0xf] %vm3442, %v3384
      %3450 = vst.msk [vmem:[%s437 + $0x1c] sm:$0xf] %vm3442, %v3385
      %3451 = vst.msk [vmem:[%s437 + $0x20] sm:$0xf] %vm3442, %v3386
      %3452 = vst.msk [vmem:[%s437 + $0x24] sm:$0xf] %vm3442, %v3387
      %3453 = vst.msk [vmem:[%s437 + $0x28] sm:$0xf] %vm3442, %v3388
      %3454 = vst.msk [vmem:[%s437 + $0x2c] sm:$0xf] %vm3442, %v3389
      %3455 = vst.msk [vmem:[%s437 + $0x30] sm:$0xf] %vm3442, %v3390
      %3456 = vst.msk [vmem:[%s437 + $0x34] sm:$0xf] %vm3442, %v3391
      %3457 = vst.msk [vmem:[%s437 + $0x38] sm:$0xf] %vm3442, %v3392
      %3458 = vst.msk [vmem:[%s437 + $0x3c] sm:$0xf] %vm3442, %v3393
      %3459 = vst.msk [vmem:[%s437 + $0x40] sm:$0xf] %vm3442, %v3394
      %3460 = vst.msk [vmem:[%s437 + $0x44] sm:$0xf] %vm3442, %v3395
      %3461 = vst.msk [vmem:[%s437 + $0x48] sm:$0xf] %vm3442, %v3396
      %3462 = vst.msk [vmem:[%s437 + $0x4c] sm:$0xf] %vm3442, %v3397
      %3463 = vst.msk [vmem:[%s437 + $0x50] sm:$0xf] %vm3442, %v3398
      %3464 = vst.msk [vmem:[%s437 + $0x54] sm:$0xf] %vm3442, %v3399
      %3465 = vst.msk [vmem:[%s437 + $0x58] sm:$0xf] %vm3442, %v3400
      %3466 = vst.msk [vmem:[%s437 + $0x5c] sm:$0xf] %vm3442, %v3401
      %3467 = vst.msk [vmem:[%s437 + $0x60] sm:$0xf] %vm3442, %v3402
      %3468 = vst.msk [vmem:[%s437 + $0x64] sm:$0xf] %vm3442, %v3403
      %3469 = vst.msk [vmem:[%s437 + $0x68] sm:$0xf] %vm3442, %v3404
      %3470 = vst.msk [vmem:[%s437 + $0x6c] sm:$0xf] %vm3442, %v3405
      %3471 = vst.msk [vmem:[%s437 + $0x70] sm:$0xf] %vm3442, %v3406
      %3472 = vst.msk [vmem:[%s437 + $0x74] sm:$0xf] %vm3442, %v3407
      %3473 = vst.msk [vmem:[%s437 + $0x78] sm:$0xf] %vm3442, %v3408
      %3474 = vst.msk [vmem:[%s437 + $0x7c] sm:$0xf] %vm3442, %v3409
      %s3475 = smul.u32 16, %s23
      %p3476 = scmp.lt.s32.totalorder %s21, 1
      %s3477 = scalar_select %p3476, %s21, 1
      %p3478 = scmp.lt.s32.totalorder %s3475, 15
      %s3479 = scalar_select %p3478, %s3475, 15
      %p3480 = scmp.lt.s32.totalorder %s22, 0
      %s3481 = scalar_select %p3480, %s22, 0
      %s3482 = smul.addr %s3479, 2
      %s3483 = sadd.s32 %s3481, %s3482
      %s3484 = smul.addr %s3477, 32
      %s3485 = sadd.s32 %s3483, %s3484
      %s3486 = smul.addr %s3485, 4
      %s3487 = scalar_lea.vmem %s5, %s3486
      // Predicated region
      $region41: #{tpu_custom_call.1} parent=39 // pred_check
        %p3488 = pneg %p209
      $region42: #{tpu_custom_call.1} parent=39 // pred_check_branch
        %3490 = sbr.rel (%p3488) target = $region44
      $region43: #{tpu_custom_call.1} parent=39 // pred_region
        %s3491 = smul.u32 16, %s23
      $region44: #{tpu_custom_call.1} parent=39 // pred_fallthru
        _
    $region40: #{tpu_custom_call.1} parent=5 // pred_fallthru
      _
    %p3492 = scmp.le.s32.totalorder 2, %s11
    // Predicated region
    $region45: #{tpu_custom_call.1} parent=5 // pred_check
      %p3493 = pneg %p3492
    $region46: #{tpu_custom_call.1} parent=5 // pred_check_branch
      %3495 = sbr.rel (%p3493) target = $region48
    $region47: #{tpu_custom_call.1} parent=5 // pred_region
      %s3496 = ssub.s32 %s11, 2
      // Predicated region
      $region49: #{tpu_custom_call.1} parent=47 // pred_check
        %p3497 = pneg %p215
      $region50: #{tpu_custom_call.1} parent=47 // pred_check_branch
        %3499 = sbr.rel (%p3497) target = $region52
      $region51: #{tpu_custom_call.1} parent=47 // pred_region
        %s3500 = smul.u32 16, %s26
        %p3501 = scmp.lt.s32.totalorder %s24, 1
        %s3502 = scalar_select %p3501, %s24, 1
        %p3503 = scmp.lt.s32.totalorder %s3500, 15
        %s3504 = scalar_select %p3503, %s3500, 15
        %p3505 = scmp.lt.s32.totalorder %s25, 0
        %s3506 = scalar_select %p3505, %s25, 0
        %s3507 = smul.addr %s3504, 2
        %s3508 = sadd.s32 %s3506, %s3507
        %s3509 = smul.addr %s3502, 32
        %s3510 = sadd.s32 %s3508, %s3509
        %s3511 = smul.addr %s3510, 4
        %s3512 = scalar_lea.vmem %s5, %s3511
      $region52: #{tpu_custom_call.1} parent=47 // pred_fallthru
        _
    $region48: #{tpu_custom_call.1} parent=5 // pred_fallthru
      _
  $region6: #{tpu_custom_call.1} parent=0 // loop_footer
    %s15 = sadd.s32 1, %s11
  $region7: #{tpu_custom_call.1} parent=0 // loop_footer_branch
    %10 = sbr.rel target = $region3
  $region8: #{tpu_custom_call.1} parent=0 // loop_exit
    _

</llo_original>
